<compile_context>
chip_gen: v7x
topology: tpu7x:2x2x1
jax: 0.10.0
libtpu: 0.0.40
codegen_flags: <defaults>
</compile_context>

<pallas_src>
import functools

import jax
import jax.numpy as jnp
import numpy as np
from jax.experimental import pallas as pl
from jax.experimental.pallas import tpu as pltpu

LANE = 128      # lane-pad every hidden feature dim to a full vreg width
SUBLANE = 8     # sublane-pad the node dim


# ----------------------------------------------------------------------------
# Padding / packing helpers (run once at parameter-build time)
# ----------------------------------------------------------------------------
def _lane_pad(d):
    return ((d + LANE - 1) // LANE) * LANE


def _pad2d(w, rows, cols):
    r, c = w.shape
    return jnp.pad(w, ((0, rows - r), (0, cols - c)))


def _pad_bias(b, n):
    return jnp.pad(b, (0, n - b.shape[0])).reshape(1, n)


def _pack_sage(wl, wr, fin_pad, fout_pad):
    """Stack neighbor/self weights so one matmul does (A@h)@Wl + h@Wr."""
    w = jnp.zeros((2 * fin_pad, fout_pad), jnp.float32)
    w = w.at[: wl.shape[0], : wl.shape[1]].set(wl)
    w = w.at[fin_pad : fin_pad + wr.shape[0], : wr.shape[1]].set(wr)
    return w


# ----------------------------------------------------------------------------
# Fused Pallas kernel: input Linear -> SAGEConv stack -> dense head
# (one grid step per batch element; weights resident across all steps)
# ----------------------------------------------------------------------------
def _fused_forward_kernel(num_convs, x_ref, adj_ref, mask_ref, w_in_ref,
                          b_in_ref, *rest):
    conv_refs = rest[: 2 * num_convs]
    (w_d1_ref, b_d1_ref, w_d2_ref, b_d2_ref,
     w_d3_ref, b_d3_ref, o_ref) = rest[2 * num_convs:]

    adj = adj_ref[...]          # [Np, Np] row-normalized adjacency (shared)
    mask = mask_ref[...]        # [Np, 1]  valid-node mask for this graph
    x = x_ref[...]              # [Np, Fe_pad] embedded features (lane-padded)

    # 1) input projection
    h = jnp.dot(x, w_in_ref[...], preferred_element_type=jnp.float32)
    h = (h + b_in_ref[...]) * mask

    # 2) SAGEConv stack: relu((A @ h) @ Wl + h @ Wr + b) as ONE packed matmul
    for c in range(num_convs):
        w_ref = conv_refs[2 * c]
        b_ref = conv_refs[2 * c + 1]
        agg = jnp.dot(adj, h, preferred_element_type=jnp.float32)   # [Np, Fp]
        hc = jnp.concatenate([agg, h], axis=-1)                     # [Np, 2Fp]
        h = jnp.dot(hc, w_ref[...], preferred_element_type=jnp.float32)
        h = jnp.maximum(h + b_ref[...], 0.0) * mask   # keep padded rows at 0

    # 3) dense head (Linear/ReLU/Linear/ReLU/Linear); dropout p=0 -> identity
    h = jnp.maximum(
        jnp.dot(h, w_d1_ref[...], preferred_element_type=jnp.float32)
        + b_d1_ref[...], 0.0)
    h = jnp.maximum(
        jnp.dot(h, w_d2_ref[...], preferred_element_type=jnp.float32)
        + b_d2_ref[...], 0.0)
    out = jnp.dot(h, w_d3_ref[...], preferred_element_type=jnp.float32)
    # lane-dense (128-wide) store; wrapper slices the 2 logical channels out
    o_ref[...] = (out + b_d3_ref[...]).astype(o_ref.dtype)


def _fused_forward(x, adj, mask, params):
    """x:[B,Np,Fe_pad], adj:[Np,Np], mask:[B,Np,1] -> [B,Np,LANE]."""
    B, n_pad, _ = x.shape
    num_convs = len(params["conv_w"])
    lane_out = params["w_d3"].shape[1]

    inputs = [x, adj, mask, params["w_in"], params["b_in"]]
    for w, b in zip(params["conv_w"], params["conv_b"]):
        inputs += [w, b]
    inputs += [params["w_d1"], params["b_d1"],
               params["w_d2"], params["b_d2"],
               params["w_d3"], params["b_d3"]]

    def batch_spec(a):
        # one graph per grid step; leading batch dim squeezed away
        return pl.BlockSpec((None,) + a.shape[1:],
                            lambda b: (b,) + (0,) * (a.ndim - 1))

    def resident_spec(a):
        # same block every step -> stays resident in VMEM (no re-DMA)
        return pl.BlockSpec(a.shape, lambda b: (0,) * a.ndim)

    in_specs = [batch_spec(x), resident_spec(adj), batch_spec(mask)]
    in_specs += [resident_spec(a) for a in inputs[3:]]

    return pl.pallas_call(
        functools.partial(_fused_forward_kernel, num_convs),
        out_shape=jax.ShapeDtypeStruct((B, n_pad, lane_out), jnp.float32),
        grid=(B,),
        in_specs=in_specs,
        out_specs=pl.BlockSpec((None, n_pad, lane_out), lambda b: (b, 0, 0)),
        compiler_params=pltpu.CompilerParams(
            dimension_semantics=("parallel",),
            vmem_limit_bytes=32 * 1024 * 1024),
    )(*inputs)


# ----------------------------------------------------------------------------
# Forward (jit-able, static shapes)
# ----------------------------------------------------------------------------
def _forward_impl(params, x_layout, x_role, edge_index, *, role_pad_idx):
    B, N, _ = x_layout.shape
    n_pad = ((N + SUBLANE - 1) // SUBLANE) * SUBLANE

    # embedding gathers + concat (glue)
    feats = [jnp.take(params["layout_emb"], x_layout[:, :, k], axis=0)
             for k in range(4)]
    feats.append(jnp.take(params["role_emb"], x_role, axis=0))
    x = jnp.concatenate(feats, axis=-1).astype(jnp.float32)        # [B, N, 80]

    fe = x.shape[-1]
    fe_pad = params["w_in"].shape[0]
    x = jnp.pad(x, ((0, 0), (0, n_pad - N), (0, fe_pad - fe)))     # [B,Np,128]

    # static-shape valid-node mask (replaces host-synced max_len crop)
    mask = (x_role != role_pad_idx).astype(jnp.float32)[:, :, None]
    mask = jnp.pad(mask, ((0, 0), (0, n_pad - N), (0, 0)))         # [B, Np, 1]

    # row-normalized mean-aggregation adjacency, shared across the batch
    src, dst = edge_index[0], edge_index[1]
    adj = jnp.zeros((n_pad, n_pad), jnp.float32).at[dst, src].add(1.0)
    adj = adj / jnp.maximum(jnp.sum(adj, axis=1, keepdims=True), 1.0)

    out = _fused_forward(x, adj, mask, params)                 # [B, Np, LANE]
    return out[:, :N, :2]                                       # [B, N, 2]


# ----------------------------------------------------------------------------
# Model (parameters initialized deterministically in-script)
# ----------------------------------------------------------------------------
class PallasGCN:
    def __init__(self, hidden_channels, graph_in, graph_out, hidden_dim,
                 num_roles=120, max_layout_size=1281, role_pad_idx=0, seed=0):
        assert len(hidden_channels) > 0
        self.role_pad_idx = role_pad_idx
        role_dim, layout_dim = 16, 16
        key = jax.random.PRNGKey(seed)
        ks = iter(jax.random.split(key, 64))

        def glorot(shape):
            lim = float(np.sqrt(6.0 / (shape[0] + shape[1])))
            return jax.random.uniform(next(ks), shape, jnp.float32, -lim, lim)

        # Embedding tables (role padding_idx=0 row is zero).
        role_emb = jax.random.normal(next(ks), (num_roles, role_dim),
                                     jnp.float32) * 0.1
        role_emb = role_emb.at[role_pad_idx].set(0.0)
        layout_emb = jax.random.normal(next(ks), (max_layout_size, layout_dim),
                                       jnp.float32) * 0.1

        in_feat = role_dim + 4 * layout_dim                        # 80
        w_in = glorot((in_feat, graph_in))
        b_in = jnp.zeros((graph_in,), jnp.float32)

        dims = [graph_in] + list(hidden_channels) + [graph_out]
        convs = []
        for d_in, d_out in zip(dims[:-1], dims[1:]):
            convs.append((glorot((d_in, d_out)),                   # Wl (aggr)
                          glorot((d_in, d_out)),                   # Wr (self)
                          jnp.zeros((d_out,), jnp.float32)))

        w_d1 = glorot((graph_out, hidden_dim))
        b_d1 = jnp.zeros((hidden_dim,), jnp.float32)
        w_d2 = glorot((hidden_dim, hidden_dim))
        b_d2 = jnp.zeros((hidden_dim,), jnp.float32)
        w_d3 = glorot((hidden_dim, 2))
        b_d3 = jnp.zeros((2,), jnp.float32)

        # Logical (unpadded) params — used by the pure-JAX reference.
        self.logical = dict(role_emb=role_emb, layout_emb=layout_emb,
                            w_in=w_in, b_in=b_in, convs=convs,
                            w_d1=w_d1, b_d1=b_d1, w_d2=w_d2, b_d2=b_d2,
                            w_d3=w_d3, b_d3=b_d3)

        # Lane-padded / packed params consumed by the fused Pallas kernel.
        fe_pad = _lane_pad(in_feat)
        dpad = [_lane_pad(d) for d in dims]
        hpad = _lane_pad(hidden_dim)
        self.params = dict(
            role_emb=role_emb, layout_emb=layout_emb,
            w_in=_pad2d(w_in, fe_pad, dpad[0]),
            b_in=_pad_bias(b_in, dpad[0]),
            conv_w=[_pack_sage(wl, wr, fi, fo)
                    for (wl, wr, _), fi, fo in zip(convs, dpad[:-1], dpad[1:])],
            conv_b=[_pad_bias(b, fo)
                    for (_, _, b), fo in zip(convs, dpad[1:])],
            w_d1=_pad2d(w_d1, dpad[-1], hpad), b_d1=_pad_bias(b_d1, hpad),
            # final projection lane-padded to 128 -> unmasked lane-dense store
            w_d2=_pad2d(w_d2, hpad, hpad), b_d2=_pad_bias(b_d2, hpad),
            w_d3=_pad2d(w_d3, hpad, LANE), b_d3=_pad_bias(b_d3, LANE),
        )

        self._jit_forward = jax.jit(
            functools.partial(_forward_impl, role_pad_idx=role_pad_idx))

    def __call__(self, x_layout, x_role, edge_index):
        return self._jit_forward(self.params, x_layout, x_role, edge_index)

    # Pure-JAX reference of the same math (unfused, unpadded) for validation.
    def reference(self, x_layout, x_role, edge_index):
        p = self.logical
        _, N, _ = x_layout.shape
        feats = [jnp.take(p["layout_emb"], x_layout[:, :, k], axis=0)
                 for k in range(4)]
        feats.append(jnp.take(p["role_emb"], x_role, axis=0))
        x = jnp.concatenate(feats, axis=-1)
        x = x @ p["w_in"] + p["b_in"]
        mask = (x_role != self.role_pad_idx).astype(jnp.float32)[..., None]
        x = x * mask
        src, dst = edge_index[0], edge_index[1]
        adj = jnp.zeros((N, N), jnp.float32).at[dst, src].add(1.0)
        adj = adj / jnp.maximum(jnp.sum(adj, axis=1, keepdims=True), 1.0)
        for wl, wr, b in p["convs"]:
            agg = jnp.einsum("ij,bjf->bif", adj, x)
            x = jnp.maximum(agg @ wl + x @ wr + b, 0.0) * mask
        h = jnp.maximum(x @ p["w_d1"] + p["b_d1"], 0.0)
        h = jnp.maximum(h @ p["w_d2"] + p["b_d2"], 0.0)
        return h @ p["w_d3"] + p["b_d3"]


# ----------------------------------------------------------------------------
if __name__ == "__main__":
    key = jax.random.PRNGKey(0)
    k1, k2, k3, k4 = jax.random.split(key, 4)

    B, N, E = 2, 8, 12
    hidden_channels = [32, 32]
    graph_in, graph_out, hidden_dim = 32, 32, 32

    # x_layout: [B, N, 4] indices into the layout embedding table.
    x_layout = jax.random.randint(k1, (B, N, 4), 0, 1281, dtype=jnp.int32)

    # x_role: [B, N] indices; 0 is the pad index (left-aligned valid nodes).
    x_role = jax.random.randint(k2, (B, N), 1, 120, dtype=jnp.int32)
    x_role = x_role.at[1, 5:].set(0)   # last 3 positions of batch 1 are padding

    # edge_index: [2, E] over nodes 0..N-1 (same graph applied per batch elem).
    src = jax.random.randint(k3, (E,), 0, N, dtype=jnp.int32)
    dst = jax.random.randint(k4, (E,), 0, N, dtype=jnp.int32)
    edge_index = jnp.stack([src, dst], axis=0)

    model = PallasGCN(hidden_channels, graph_in, graph_out, hidden_dim, seed=0)
    out = model(x_layout, x_role, edge_index)
    jax.block_until_ready(out)

    assert out.shape == (B, N, 2), out.shape
    assert out.dtype == jnp.float32
    assert bool(jnp.all(jnp.isfinite(out)))

    # Numerical check of the fused/packed/padded kernel against plain JAX.
    ref = model.reference(x_layout, x_role, edge_index)
    max_err = float(jnp.max(jnp.abs(out - ref)))
    assert max_err < 5e-2, f"max abs err {max_err}"

    print("KERNEL_OK")
</pallas_src>

<mosaic_0001>
module attributes {stable_mosaic.version = 11 : i64} {
  func.func @_fused_forward_kernel(%arg0: i32, %arg1: memref<1x8x128xf32, #tpu.memory_space<vmem>>, %arg2: memref<8x8xf32, #tpu.memory_space<vmem>>, %arg3: memref<1x8x1xf32, #tpu.memory_space<vmem>>, %arg4: memref<128x128xf32, #tpu.memory_space<vmem>>, %arg5: memref<1x128xf32, #tpu.memory_space<vmem>>, %arg6: memref<256x128xf32, #tpu.memory_space<vmem>>, %arg7: memref<1x128xf32, #tpu.memory_space<vmem>>, %arg8: memref<256x128xf32, #tpu.memory_space<vmem>>, %arg9: memref<1x128xf32, #tpu.memory_space<vmem>>, %arg10: memref<256x128xf32, #tpu.memory_space<vmem>>, %arg11: memref<1x128xf32, #tpu.memory_space<vmem>>, %arg12: memref<128x128xf32, #tpu.memory_space<vmem>>, %arg13: memref<1x128xf32, #tpu.memory_space<vmem>>, %arg14: memref<128x128xf32, #tpu.memory_space<vmem>>, %arg15: memref<1x128xf32, #tpu.memory_space<vmem>>, %arg16: memref<128x128xf32, #tpu.memory_space<vmem>>, %arg17: memref<1x128xf32, #tpu.memory_space<vmem>>, %arg18: memref<1x8x128xf32, #tpu.memory_space<vmem>>) attributes {dimension_semantics = [#tpu.dimension_semantics<parallel>], iteration_bounds = array<i64: 2>, scalar_prefetch = 0 : i64, scratch_operands = 0 : i64, tpu.core_type = #tpu.core_type<tc>, window_params = [{transform_indices = @transform_0, window_bounds = array<i64: 1, 8, 128>}, {pipeline_mode = #tpu.pipeline_mode<synchronous>, transform_indices = @transform_1, window_bounds = array<i64: 8, 8>}, {transform_indices = @transform_2, window_bounds = array<i64: 1, 8, 1>}, {pipeline_mode = #tpu.pipeline_mode<synchronous>, transform_indices = @transform_3, window_bounds = array<i64: 128, 128>}, {pipeline_mode = #tpu.pipeline_mode<synchronous>, transform_indices = @transform_4, window_bounds = array<i64: 1, 128>}, {pipeline_mode = #tpu.pipeline_mode<synchronous>, transform_indices = @transform_5, window_bounds = array<i64: 256, 128>}, {pipeline_mode = #tpu.pipeline_mode<synchronous>, transform_indices = @transform_6, window_bounds = array<i64: 1, 128>}, {pipeline_mode = #tpu.pipeline_mode<synchronous>, transform_indices = @transform_7, window_bounds = array<i64: 256, 128>}, {pipeline_mode = #tpu.pipeline_mode<synchronous>, transform_indices = @transform_8, window_bounds = array<i64: 1, 128>}, {pipeline_mode = #tpu.pipeline_mode<synchronous>, transform_indices = @transform_9, window_bounds = array<i64: 256, 128>}, {pipeline_mode = #tpu.pipeline_mode<synchronous>, transform_indices = @transform_10, window_bounds = array<i64: 1, 128>}, {pipeline_mode = #tpu.pipeline_mode<synchronous>, transform_indices = @transform_11, window_bounds = array<i64: 128, 128>}, {pipeline_mode = #tpu.pipeline_mode<synchronous>, transform_indices = @transform_12, window_bounds = array<i64: 1, 128>}, {pipeline_mode = #tpu.pipeline_mode<synchronous>, transform_indices = @transform_13, window_bounds = array<i64: 128, 128>}, {pipeline_mode = #tpu.pipeline_mode<synchronous>, transform_indices = @transform_14, window_bounds = array<i64: 1, 128>}, {pipeline_mode = #tpu.pipeline_mode<synchronous>, transform_indices = @transform_15, window_bounds = array<i64: 128, 128>}, {pipeline_mode = #tpu.pipeline_mode<synchronous>, transform_indices = @transform_16, window_bounds = array<i64: 1, 128>}, {transform_indices = @transform_17, window_bounds = array<i64: 1, 8, 128>}]} {
    %c0 = arith.constant 0 : index
    %c0_0 = arith.constant 0 : index
    %0 = vector.load %arg2[%c0, %c0_0] : memref<8x8xf32, #tpu.memory_space<vmem>>, vector<8x8xf32>
    %c0_1 = arith.constant 0 : index
    %c0_2 = arith.constant 0 : index
    %c0_3 = arith.constant 0 : index
    %1 = vector.load %arg3[%c0_1, %c0_2, %c0_3] : memref<1x8x1xf32, #tpu.memory_space<vmem>>, vector<1x8x1xf32>
    %2 = vector.shape_cast %1 : vector<1x8x1xf32> to vector<8x1xf32>
    %c0_4 = arith.constant 0 : index
    %c0_5 = arith.constant 0 : index
    %c0_6 = arith.constant 0 : index
    %3 = vector.load %arg1[%c0_4, %c0_5, %c0_6] : memref<1x8x128xf32, #tpu.memory_space<vmem>>, vector<1x8x128xf32>
    %4 = vector.shape_cast %3 : vector<1x8x128xf32> to vector<8x128xf32>
    %c0_7 = arith.constant 0 : index
    %c0_8 = arith.constant 0 : index
    %5 = vector.load %arg4[%c0_7, %c0_8] : memref<128x128xf32, #tpu.memory_space<vmem>>, vector<128x128xf32>
    %cst = arith.constant dense<0.000000e+00> : vector<8x128xf32>
    %6 = tpu.matmul %4, %5, %cst {dimension_numbers = #tpu.dot_dimension_numbers<[1], [0], [0], [1], [0, 0, 1, 1], [], []>} : vector<8x128xf32>, vector<128x128xf32>, vector<8x128xf32> -> vector<8x128xf32>
    %c0_9 = arith.constant 0 : index
    %c0_10 = arith.constant 0 : index
    %7 = vector.load %arg5[%c0_9, %c0_10] : memref<1x128xf32, #tpu.memory_space<vmem>>, vector<1x128xf32>
    %8 = vector.broadcast %7 : vector<1x128xf32> to vector<8x128xf32>
    %9 = arith.addf %6, %8 : vector<8x128xf32>
    %10 = vector.broadcast %2 : vector<8x1xf32> to vector<8x128xf32>
    %11 = arith.mulf %9, %10 : vector<8x128xf32>
    %cst_11 = arith.constant dense<0.000000e+00> : vector<8x128xf32>
    %12 = tpu.matmul %0, %11, %cst_11 {dimension_numbers = #tpu.dot_dimension_numbers<[1], [0], [0], [1], [0, 0, 1, 1], [], []>} : vector<8x8xf32>, vector<8x128xf32>, vector<8x128xf32> -> vector<8x128xf32>
    %13 = tpu.concatenate %12, %11 in 1 : vector<8x128xf32>, vector<8x128xf32> -> vector<8x256xf32>
    %c0_12 = arith.constant 0 : index
    %c0_13 = arith.constant 0 : index
    %14 = vector.load %arg6[%c0_12, %c0_13] : memref<256x128xf32, #tpu.memory_space<vmem>>, vector<256x128xf32>
    %cst_14 = arith.constant dense<0.000000e+00> : vector<8x128xf32>
    %15 = tpu.matmul %13, %14, %cst_14 {dimension_numbers = #tpu.dot_dimension_numbers<[1], [0], [0], [1], [0, 0, 1, 1], [], []>} : vector<8x256xf32>, vector<256x128xf32>, vector<8x128xf32> -> vector<8x128xf32>
    %c0_15 = arith.constant 0 : index
    %c0_16 = arith.constant 0 : index
    %16 = vector.load %arg7[%c0_15, %c0_16] : memref<1x128xf32, #tpu.memory_space<vmem>>, vector<1x128xf32>
    %17 = vector.broadcast %16 : vector<1x128xf32> to vector<8x128xf32>
    %18 = arith.addf %15, %17 : vector<8x128xf32>
    %cst_17 = arith.constant 0.000000e+00 : f32
    %19 = vector.broadcast %cst_17 : f32 to vector<8x128xf32>
    %20 = arith.maximumf %18, %19 : vector<8x128xf32>
    %21 = vector.broadcast %2 : vector<8x1xf32> to vector<8x128xf32>
    %22 = arith.mulf %20, %21 : vector<8x128xf32>
    %cst_18 = arith.constant dense<0.000000e+00> : vector<8x128xf32>
    %23 = tpu.matmul %0, %22, %cst_18 {dimension_numbers = #tpu.dot_dimension_numbers<[1], [0], [0], [1], [0, 0, 1, 1], [], []>} : vector<8x8xf32>, vector<8x128xf32>, vector<8x128xf32> -> vector<8x128xf32>
    %24 = tpu.concatenate %23, %22 in 1 : vector<8x128xf32>, vector<8x128xf32> -> vector<8x256xf32>
    %c0_19 = arith.constant 0 : index
    %c0_20 = arith.constant 0 : index
    %25 = vector.load %arg8[%c0_19, %c0_20] : memref<256x128xf32, #tpu.memory_space<vmem>>, vector<256x128xf32>
    %cst_21 = arith.constant dense<0.000000e+00> : vector<8x128xf32>
    %26 = tpu.matmul %24, %25, %cst_21 {dimension_numbers = #tpu.dot_dimension_numbers<[1], [0], [0], [1], [0, 0, 1, 1], [], []>} : vector<8x256xf32>, vector<256x128xf32>, vector<8x128xf32> -> vector<8x128xf32>
    %c0_22 = arith.constant 0 : index
    %c0_23 = arith.constant 0 : index
    %27 = vector.load %arg9[%c0_22, %c0_23] : memref<1x128xf32, #tpu.memory_space<vmem>>, vector<1x128xf32>
    %28 = vector.broadcast %27 : vector<1x128xf32> to vector<8x128xf32>
    %29 = arith.addf %26, %28 : vector<8x128xf32>
    %cst_24 = arith.constant 0.000000e+00 : f32
    %30 = vector.broadcast %cst_24 : f32 to vector<8x128xf32>
    %31 = arith.maximumf %29, %30 : vector<8x128xf32>
    %32 = vector.broadcast %2 : vector<8x1xf32> to vector<8x128xf32>
    %33 = arith.mulf %31, %32 : vector<8x128xf32>
    %cst_25 = arith.constant dense<0.000000e+00> : vector<8x128xf32>
    %34 = tpu.matmul %0, %33, %cst_25 {dimension_numbers = #tpu.dot_dimension_numbers<[1], [0], [0], [1], [0, 0, 1, 1], [], []>} : vector<8x8xf32>, vector<8x128xf32>, vector<8x128xf32> -> vector<8x128xf32>
    %35 = tpu.concatenate %34, %33 in 1 : vector<8x128xf32>, vector<8x128xf32> -> vector<8x256xf32>
    %c0_26 = arith.constant 0 : index
    %c0_27 = arith.constant 0 : index
    %36 = vector.load %arg10[%c0_26, %c0_27] : memref<256x128xf32, #tpu.memory_space<vmem>>, vector<256x128xf32>
    %cst_28 = arith.constant dense<0.000000e+00> : vector<8x128xf32>
    %37 = tpu.matmul %35, %36, %cst_28 {dimension_numbers = #tpu.dot_dimension_numbers<[1], [0], [0], [1], [0, 0, 1, 1], [], []>} : vector<8x256xf32>, vector<256x128xf32>, vector<8x128xf32> -> vector<8x128xf32>
    %c0_29 = arith.constant 0 : index
    %c0_30 = arith.constant 0 : index
    %38 = vector.load %arg11[%c0_29, %c0_30] : memref<1x128xf32, #tpu.memory_space<vmem>>, vector<1x128xf32>
    %39 = vector.broadcast %38 : vector<1x128xf32> to vector<8x128xf32>
    %40 = arith.addf %37, %39 : vector<8x128xf32>
    %cst_31 = arith.constant 0.000000e+00 : f32
    %41 = vector.broadcast %cst_31 : f32 to vector<8x128xf32>
    %42 = arith.maximumf %40, %41 : vector<8x128xf32>
    %43 = vector.broadcast %2 : vector<8x1xf32> to vector<8x128xf32>
    %44 = arith.mulf %42, %43 : vector<8x128xf32>
    %c0_32 = arith.constant 0 : index
    %c0_33 = arith.constant 0 : index
    %45 = vector.load %arg12[%c0_32, %c0_33] : memref<128x128xf32, #tpu.memory_space<vmem>>, vector<128x128xf32>
    %cst_34 = arith.constant dense<0.000000e+00> : vector<8x128xf32>
    %46 = tpu.matmul %44, %45, %cst_34 {dimension_numbers = #tpu.dot_dimension_numbers<[1], [0], [0], [1], [0, 0, 1, 1], [], []>} : vector<8x128xf32>, vector<128x128xf32>, vector<8x128xf32> -> vector<8x128xf32>
    %c0_35 = arith.constant 0 : index
    %c0_36 = arith.constant 0 : index
    %47 = vector.load %arg13[%c0_35, %c0_36] : memref<1x128xf32, #tpu.memory_space<vmem>>, vector<1x128xf32>
    %48 = vector.broadcast %47 : vector<1x128xf32> to vector<8x128xf32>
    %49 = arith.addf %46, %48 : vector<8x128xf32>
    %cst_37 = arith.constant 0.000000e+00 : f32
    %50 = vector.broadcast %cst_37 : f32 to vector<8x128xf32>
    %51 = arith.maximumf %49, %50 : vector<8x128xf32>
    %c0_38 = arith.constant 0 : index
    %c0_39 = arith.constant 0 : index
    %52 = vector.load %arg14[%c0_38, %c0_39] : memref<128x128xf32, #tpu.memory_space<vmem>>, vector<128x128xf32>
    %cst_40 = arith.constant dense<0.000000e+00> : vector<8x128xf32>
    %53 = tpu.matmul %51, %52, %cst_40 {dimension_numbers = #tpu.dot_dimension_numbers<[1], [0], [0], [1], [0, 0, 1, 1], [], []>} : vector<8x128xf32>, vector<128x128xf32>, vector<8x128xf32> -> vector<8x128xf32>
    %c0_41 = arith.constant 0 : index
    %c0_42 = arith.constant 0 : index
    %54 = vector.load %arg15[%c0_41, %c0_42] : memref<1x128xf32, #tpu.memory_space<vmem>>, vector<1x128xf32>
    %55 = vector.broadcast %54 : vector<1x128xf32> to vector<8x128xf32>
    %56 = arith.addf %53, %55 : vector<8x128xf32>
    %cst_43 = arith.constant 0.000000e+00 : f32
    %57 = vector.broadcast %cst_43 : f32 to vector<8x128xf32>
    %58 = arith.maximumf %56, %57 : vector<8x128xf32>
    %c0_44 = arith.constant 0 : index
    %c0_45 = arith.constant 0 : index
    %59 = vector.load %arg16[%c0_44, %c0_45] : memref<128x128xf32, #tpu.memory_space<vmem>>, vector<128x128xf32>
    %cst_46 = arith.constant dense<0.000000e+00> : vector<8x128xf32>
    %60 = tpu.matmul %58, %59, %cst_46 {dimension_numbers = #tpu.dot_dimension_numbers<[1], [0], [0], [1], [0, 0, 1, 1], [], []>} : vector<8x128xf32>, vector<128x128xf32>, vector<8x128xf32> -> vector<8x128xf32>
    %c0_47 = arith.constant 0 : index
    %c0_48 = arith.constant 0 : index
    %61 = vector.load %arg17[%c0_47, %c0_48] : memref<1x128xf32, #tpu.memory_space<vmem>>, vector<1x128xf32>
    %62 = vector.broadcast %61 : vector<1x128xf32> to vector<8x128xf32>
    %63 = arith.addf %60, %62 : vector<8x128xf32>
    %c0_49 = arith.constant 0 : index
    %c0_50 = arith.constant 0 : index
    %c0_51 = arith.constant 0 : index
    %64 = vector.load %arg18[%c0_49, %c0_50, %c0_51] : memref<1x8x128xf32, #tpu.memory_space<vmem>>, vector<1x8x128xf32>
    %65 = vector.shape_cast %64 : vector<1x8x128xf32> to vector<8x128xf32>
    %66 = vector.shape_cast %63 : vector<8x128xf32> to vector<1x8x128xf32>
    tpu.vector_store %arg18[%c0_49, %c0_50, %c0_51], %66 {strides = array<i32>} : memref<1x8x128xf32, #tpu.memory_space<vmem>>, vector<1x8x128xf32>,
    return
  }
  func.func @transform_0(%arg0: i32) -> (i32, i32, i32) {
    %c0_i32 = arith.constant 0 : i32
    %c0_i32_0 = arith.constant 0 : i32
    %c0_i32_1 = arith.constant 0 : i32
    return %arg0, %c0_i32, %c0_i32_0 : i32, i32, i32
  }
  func.func @transform_1(%arg0: i32) -> (i32, i32) {
    %c0_i32 = arith.constant 0 : i32
    %c0_i32_0 = arith.constant 0 : i32
    %c0_i32_1 = arith.constant 0 : i32
    return %c0_i32, %c0_i32_0 : i32, i32
  }
  func.func @transform_2(%arg0: i32) -> (i32, i32, i32) {
    %c0_i32 = arith.constant 0 : i32
    %c0_i32_0 = arith.constant 0 : i32
    %c0_i32_1 = arith.constant 0 : i32
    return %arg0, %c0_i32, %c0_i32_0 : i32, i32, i32
  }
  func.func @transform_3(%arg0: i32) -> (i32, i32) {
    %c0_i32 = arith.constant 0 : i32
    %c0_i32_0 = arith.constant 0 : i32
    %c0_i32_1 = arith.constant 0 : i32
    return %c0_i32, %c0_i32_0 : i32, i32
  }
  func.func @transform_4(%arg0: i32) -> (i32, i32) {
    %c0_i32 = arith.constant 0 : i32
    %c0_i32_0 = arith.constant 0 : i32
    %c0_i32_1 = arith.constant 0 : i32
    return %c0_i32, %c0_i32_0 : i32, i32
  }
  func.func @transform_5(%arg0: i32) -> (i32, i32) {
    %c0_i32 = arith.constant 0 : i32
    %c0_i32_0 = arith.constant 0 : i32
    %c0_i32_1 = arith.constant 0 : i32
    return %c0_i32, %c0_i32_0 : i32, i32
  }
  func.func @transform_6(%arg0: i32) -> (i32, i32) {
    %c0_i32 = arith.constant 0 : i32
    %c0_i32_0 = arith.constant 0 : i32
    %c0_i32_1 = arith.constant 0 : i32
    return %c0_i32, %c0_i32_0 : i32, i32
  }
  func.func @transform_7(%arg0: i32) -> (i32, i32) {
    %c0_i32 = arith.constant 0 : i32
    %c0_i32_0 = arith.constant 0 : i32
    %c0_i32_1 = arith.constant 0 : i32
    return %c0_i32, %c0_i32_0 : i32, i32
  }
  func.func @transform_8(%arg0: i32) -> (i32, i32) {
    %c0_i32 = arith.constant 0 : i32
    %c0_i32_0 = arith.constant 0 : i32
    %c0_i32_1 = arith.constant 0 : i32
    return %c0_i32, %c0_i32_0 : i32, i32
  }
  func.func @transform_9(%arg0: i32) -> (i32, i32) {
    %c0_i32 = arith.constant 0 : i32
    %c0_i32_0 = arith.constant 0 : i32
    %c0_i32_1 = arith.constant 0 : i32
    return %c0_i32, %c0_i32_0 : i32, i32
  }
  func.func @transform_10(%arg0: i32) -> (i32, i32) {
    %c0_i32 = arith.constant 0 : i32
    %c0_i32_0 = arith.constant 0 : i32
    %c0_i32_1 = arith.constant 0 : i32
    return %c0_i32, %c0_i32_0 : i32, i32
  }
  func.func @transform_11(%arg0: i32) -> (i32, i32) {
    %c0_i32 = arith.constant 0 : i32
    %c0_i32_0 = arith.constant 0 : i32
    %c0_i32_1 = arith.constant 0 : i32
    return %c0_i32, %c0_i32_0 : i32, i32
  }
  func.func @transform_12(%arg0: i32) -> (i32, i32) {
    %c0_i32 = arith.constant 0 : i32
    %c0_i32_0 = arith.constant 0 : i32
    %c0_i32_1 = arith.constant 0 : i32
    return %c0_i32, %c0_i32_0 : i32, i32
  }
  func.func @transform_13(%arg0: i32) -> (i32, i32) {
    %c0_i32 = arith.constant 0 : i32
    %c0_i32_0 = arith.constant 0 : i32
    %c0_i32_1 = arith.constant 0 : i32
    return %c0_i32, %c0_i32_0 : i32, i32
  }
  func.func @transform_14(%arg0: i32) -> (i32, i32) {
    %c0_i32 = arith.constant 0 : i32
    %c0_i32_0 = arith.constant 0 : i32
    %c0_i32_1 = arith.constant 0 : i32
    return %c0_i32, %c0_i32_0 : i32, i32
  }
  func.func @transform_15(%arg0: i32) -> (i32, i32) {
    %c0_i32 = arith.constant 0 : i32
    %c0_i32_0 = arith.constant 0 : i32
    %c0_i32_1 = arith.constant 0 : i32
    return %c0_i32, %c0_i32_0 : i32, i32
  }
  func.func @transform_16(%arg0: i32) -> (i32, i32) {
    %c0_i32 = arith.constant 0 : i32
    %c0_i32_0 = arith.constant 0 : i32
    %c0_i32_1 = arith.constant 0 : i32
    return %c0_i32, %c0_i32_0 : i32, i32
  }
  func.func @transform_17(%arg0: i32) -> (i32, i32, i32) {
    %c0_i32 = arith.constant 0 : i32
    %c0_i32_0 = arith.constant 0 : i32
    %c0_i32_1 = arith.constant 0 : i32
    return %arg0, %c0_i32, %c0_i32_0 : i32, i32, i32
  }
}

</mosaic_0001>

<llo_original>
// kernel: _forward_impl.1
$region0: #{_forward_impl.1}
  #allocation0 [shape = 'u32[]', space=smem, size = 0x4, offset = 0x4, fixed_abs, tag = 'smem constant byte address 0x4 - core index']
  #allocation1 [shape = 'u32[144,128]{1,0:T(1,128)}', space=vmem, size = 0x12000, scoped, tag = 'internal scratch']
  %s0 = inlined_call_operand.vmem [shape: f32[2,8,128], index: 0, kind: input, shape index: {}]
  %s1 = inlined_call_operand.vmem [shape: f32[8,8], index: 1, kind: input, shape index: {}]
  %s2 = inlined_call_operand.vmem [shape: f32[2,8,1], index: 2, kind: input, shape index: {}]
  %s3 = inlined_call_operand.vmem [shape: f32[128,128], index: 3, kind: input, shape index: {}]
  %s4 = inlined_call_operand.vmem [shape: f32[1,128], index: 4, kind: input, shape index: {}]
  %s5 = inlined_call_operand.vmem [shape: f32[256,128], index: 5, kind: input, shape index: {}]
  %s6 = inlined_call_operand.vmem [shape: f32[1,128], index: 6, kind: input, shape index: {}]
  %s7 = inlined_call_operand.vmem [shape: f32[256,128], index: 7, kind: input, shape index: {}]
  %s8 = inlined_call_operand.vmem [shape: f32[1,128], index: 8, kind: input, shape index: {}]
  %s9 = inlined_call_operand.vmem [shape: f32[256,128], index: 9, kind: input, shape index: {}]
  %s10 = inlined_call_operand.vmem [shape: f32[1,128], index: 10, kind: input, shape index: {}]
  %s11 = inlined_call_operand.vmem [shape: f32[128,128], index: 11, kind: input, shape index: {}]
  %s12 = inlined_call_operand.vmem [shape: f32[1,128], index: 12, kind: input, shape index: {}]
  %s13 = inlined_call_operand.vmem [shape: f32[128,128], index: 13, kind: input, shape index: {}]
  %s14 = inlined_call_operand.vmem [shape: f32[1,128], index: 14, kind: input, shape index: {}]
  %s15 = inlined_call_operand.vmem [shape: f32[128,128], index: 15, kind: input, shape index: {}]
  %s16 = inlined_call_operand.vmem [shape: f32[1,128], index: 16, kind: input, shape index: {}]
  %s17 = inlined_call_operand.vmem [shape: f32[2,8,128], index: 17, kind: output, shape index: {}]
  %s18 = sld [smem:[#allocation0]]
  $region101: #{_forward_impl.1} parent=0
    _
  %s20 = ssub.s32 1, %s18
  %s21 = scalar_select 0, %s20, %s18
  loop: start=0, step=1, limit=4
  $region2: #{_forward_impl.1} parent=0 // loop_pre_header
    _
  $region3: #{_forward_impl.1} parent=0 // loop_header
    %s23 = sphi 0, %s27
    %p24 = scmp.ge.s32.totalorder %s23, 4
    %s33 = sphi 0, %s35
    %s36 = sphi 0, %s33
    %s37 = sphi 0, %s36
    %s53 = sphi 0, %s37
    %s57 = sphi 0, %s57
    %s59 = sphi 0, %s57
    %s60 = sphi 0, %s59
    %s74 = sphi 0, %s60
    %s80 = sphi 0, %s82
    %s83 = sphi 0, %s80
    %s84 = sphi 0, %s83
    %s100 = sphi 0, %s84
    %s104 = sphi 0, %s104
    %s106 = sphi 0, %s104
    %s107 = sphi 0, %s106
    %s121 = sphi 0, %s107
    %s125 = sphi 0, %s125
    %s127 = sphi 0, %s125
    %s128 = sphi 0, %s127
    %s142 = sphi 0, %s128
    %s146 = sphi 0, %s146
    %s148 = sphi 0, %s146
    %s149 = sphi 0, %s148
    %s163 = sphi 0, %s149
    %s167 = sphi 0, %s167
    %s169 = sphi 0, %s167
    %s170 = sphi 0, %s169
    %s184 = sphi 0, %s170
    %s188 = sphi 0, %s188
    %s190 = sphi 0, %s188
    %s191 = sphi 0, %s190
    %s205 = sphi 0, %s191
    %s209 = sphi 0, %s209
    %s211 = sphi 0, %s209
    %s212 = sphi 0, %s211
    %s226 = sphi 0, %s212
    %s230 = sphi 0, %s230
    %s232 = sphi 0, %s230
    %s233 = sphi 0, %s232
    %s247 = sphi 0, %s233
    %s251 = sphi 0, %s251
    %s253 = sphi 0, %s251
    %s254 = sphi 0, %s253
    %s268 = sphi 0, %s254
    %s272 = sphi 0, %s272
    %s274 = sphi 0, %s272
    %s275 = sphi 0, %s274
    %s289 = sphi 0, %s275
    %s293 = sphi 0, %s293
    %s295 = sphi 0, %s293
    %s296 = sphi 0, %s295
    %s310 = sphi 0, %s296
    %s314 = sphi 0, %s314
    %s316 = sphi 0, %s314
    %s317 = sphi 0, %s316
    %s331 = sphi 0, %s317
    %s335 = sphi 0, %s335
    %s337 = sphi 0, %s335
    %s338 = sphi 0, %s337
    %s352 = sphi 0, %s338
    %s356 = sphi 0, %s356
    %s358 = sphi 0, %s356
    %s359 = sphi 0, %s358
    %s373 = sphi 0, %s359
    %s377 = sphi 0, %s377
    %s379 = sphi 0, %s377
    %s380 = sphi 0, %s379
    %s394 = sphi 0, %s380
    %s400 = sphi 0, %s402
    %s403 = sphi 0, %s400
    %s404 = sphi 0, %s403
    %s420 = sphi 0, %s404
  $region4: #{_forward_impl.1} parent=0 // loop_header_branch
    %26 = sbr.rel (%p24) target = $region8
  $region5: #{_forward_impl.1} parent=0 // loop_body
    %s28 = ssub.s32 %s23, 1
    %s29 = ssub.s32 %s23, 2
    %s30 = sadd.s32 %s23, 1
    %s31 = ssub.s32 %s23, %s30
    %p32 = scmp.eq.s32.totalorder %s31, 0
    %s34 = sadd.s32 %s33, 1
    %s35 = scalar_select %p32, %s33, %s34
    %p38 = pneg %p32
    %p39 = scmp.eq.s32.totalorder %s23, 1
    %p40 = por %p38, %p39
    %p41 = scmp.ne.s32.totalorder %s33, %s36
    %p42 = scmp.eq.s32.totalorder %s23, 0
    %p43 = por %p41, %p42
    %p44 = scmp.ne.s32.totalorder %s33, %s36
    %p45 = scmp.eq.s32.totalorder %s28, 1
    %p46 = por %p44, %p45
    %p47 = scmp.ne.s32.totalorder %s36, %s37
    %p48 = scmp.eq.s32.totalorder %s28, 0
    %p49 = por %p47, %p48
    %p50 = scmp.ne.s32.totalorder %s36, %s37
    %p51 = scmp.eq.s32.totalorder %s29, 1
    %p52 = por %p50, %p51
    %p54 = scmp.ne.s32.totalorder %s37, %s53
    %p55 = scmp.eq.s32.totalorder %s29, 0
    %p56 = por %p54, %p55
    %s58 = sadd.s32 %s57, 1
    %p61 = scmp.eq.s32.totalorder %s23, 1
    %p62 = scmp.ne.s32.totalorder %s57, %s59
    %p63 = scmp.eq.s32.totalorder %s23, 0
    %p64 = por %p62, %p63
    %p65 = scmp.ne.s32.totalorder %s57, %s59
    %p66 = scmp.eq.s32.totalorder %s28, 1
    %p67 = por %p65, %p66
    %p68 = scmp.ne.s32.totalorder %s59, %s60
    %p69 = scmp.eq.s32.totalorder %s28, 0
    %p70 = por %p68, %p69
    %p71 = scmp.ne.s32.totalorder %s59, %s60
    %p72 = scmp.eq.s32.totalorder %s29, 1
    %p73 = por %p71, %p72
    %p75 = scmp.ne.s32.totalorder %s60, %s74
    %p76 = scmp.eq.s32.totalorder %s29, 0
    %p77 = por %p75, %p76
    %s78 = ssub.s32 %s23, %s30
    %p79 = scmp.eq.s32.totalorder %s78, 0
    %s81 = sadd.s32 %s80, 1
    %s82 = scalar_select %p79, %s80, %s81
    %p85 = pneg %p79
    %p86 = scmp.eq.s32.totalorder %s23, 1
    %p87 = por %p85, %p86
    %p88 = scmp.ne.s32.totalorder %s80, %s83
    %p89 = scmp.eq.s32.totalorder %s23, 0
    %p90 = por %p88, %p89
    %p91 = scmp.ne.s32.totalorder %s80, %s83
    %p92 = scmp.eq.s32.totalorder %s28, 1
    %p93 = por %p91, %p92
    %p94 = scmp.ne.s32.totalorder %s83, %s84
    %p95 = scmp.eq.s32.totalorder %s28, 0
    %p96 = por %p94, %p95
    %p97 = scmp.ne.s32.totalorder %s83, %s84
    %p98 = scmp.eq.s32.totalorder %s29, 1
    %p99 = por %p97, %p98
    %p101 = scmp.ne.s32.totalorder %s84, %s100
    %p102 = scmp.eq.s32.totalorder %s29, 0
    %p103 = por %p101, %p102
    %s105 = sadd.s32 %s104, 1
    %p108 = scmp.eq.s32.totalorder %s23, 1
    %p109 = scmp.ne.s32.totalorder %s104, %s106
    %p110 = scmp.eq.s32.totalorder %s23, 0
    %p111 = por %p109, %p110
    %p112 = scmp.ne.s32.totalorder %s104, %s106
    %p113 = scmp.eq.s32.totalorder %s28, 1
    %p114 = por %p112, %p113
    %p115 = scmp.ne.s32.totalorder %s106, %s107
    %p116 = scmp.eq.s32.totalorder %s28, 0
    %p117 = por %p115, %p116
    %p118 = scmp.ne.s32.totalorder %s106, %s107
    %p119 = scmp.eq.s32.totalorder %s29, 1
    %p120 = por %p118, %p119
    %p122 = scmp.ne.s32.totalorder %s107, %s121
    %p123 = scmp.eq.s32.totalorder %s29, 0
    %p124 = por %p122, %p123
    %s126 = sadd.s32 %s125, 1
    %p129 = scmp.eq.s32.totalorder %s23, 1
    %p130 = scmp.ne.s32.totalorder %s125, %s127
    %p131 = scmp.eq.s32.totalorder %s23, 0
    %p132 = por %p130, %p131
    %p133 = scmp.ne.s32.totalorder %s125, %s127
    %p134 = scmp.eq.s32.totalorder %s28, 1
    %p135 = por %p133, %p134
    %p136 = scmp.ne.s32.totalorder %s127, %s128
    %p137 = scmp.eq.s32.totalorder %s28, 0
    %p138 = por %p136, %p137
    %p139 = scmp.ne.s32.totalorder %s127, %s128
    %p140 = scmp.eq.s32.totalorder %s29, 1
    %p141 = por %p139, %p140
    %p143 = scmp.ne.s32.totalorder %s128, %s142
    %p144 = scmp.eq.s32.totalorder %s29, 0
    %p145 = por %p143, %p144
    %s147 = sadd.s32 %s146, 1
    %p150 = scmp.eq.s32.totalorder %s23, 1
    %p151 = scmp.ne.s32.totalorder %s146, %s148
    %p152 = scmp.eq.s32.totalorder %s23, 0
    %p153 = por %p151, %p152
    %p154 = scmp.ne.s32.totalorder %s146, %s148
    %p155 = scmp.eq.s32.totalorder %s28, 1
    %p156 = por %p154, %p155
    %p157 = scmp.ne.s32.totalorder %s148, %s149
    %p158 = scmp.eq.s32.totalorder %s28, 0
    %p159 = por %p157, %p158
    %p160 = scmp.ne.s32.totalorder %s148, %s149
    %p161 = scmp.eq.s32.totalorder %s29, 1
    %p162 = por %p160, %p161
    %p164 = scmp.ne.s32.totalorder %s149, %s163
    %p165 = scmp.eq.s32.totalorder %s29, 0
    %p166 = por %p164, %p165
    %s168 = sadd.s32 %s167, 1
    %p171 = scmp.eq.s32.totalorder %s23, 1
    %p172 = scmp.ne.s32.totalorder %s167, %s169
    %p173 = scmp.eq.s32.totalorder %s23, 0
    %p174 = por %p172, %p173
    %p175 = scmp.ne.s32.totalorder %s167, %s169
    %p176 = scmp.eq.s32.totalorder %s28, 1
    %p177 = por %p175, %p176
    %p178 = scmp.ne.s32.totalorder %s169, %s170
    %p179 = scmp.eq.s32.totalorder %s28, 0
    %p180 = por %p178, %p179
    %p181 = scmp.ne.s32.totalorder %s169, %s170
    %p182 = scmp.eq.s32.totalorder %s29, 1
    %p183 = por %p181, %p182
    %p185 = scmp.ne.s32.totalorder %s170, %s184
    %p186 = scmp.eq.s32.totalorder %s29, 0
    %p187 = por %p185, %p186
    %s189 = sadd.s32 %s188, 1
    %p192 = scmp.eq.s32.totalorder %s23, 1
    %p193 = scmp.ne.s32.totalorder %s188, %s190
    %p194 = scmp.eq.s32.totalorder %s23, 0
    %p195 = por %p193, %p194
    %p196 = scmp.ne.s32.totalorder %s188, %s190
    %p197 = scmp.eq.s32.totalorder %s28, 1
    %p198 = por %p196, %p197
    %p199 = scmp.ne.s32.totalorder %s190, %s191
    %p200 = scmp.eq.s32.totalorder %s28, 0
    %p201 = por %p199, %p200
    %p202 = scmp.ne.s32.totalorder %s190, %s191
    %p203 = scmp.eq.s32.totalorder %s29, 1
    %p204 = por %p202, %p203
    %p206 = scmp.ne.s32.totalorder %s191, %s205
    %p207 = scmp.eq.s32.totalorder %s29, 0
    %p208 = por %p206, %p207
    %s210 = sadd.s32 %s209, 1
    %p213 = scmp.eq.s32.totalorder %s23, 1
    %p214 = scmp.ne.s32.totalorder %s209, %s211
    %p215 = scmp.eq.s32.totalorder %s23, 0
    %p216 = por %p214, %p215
    %p217 = scmp.ne.s32.totalorder %s209, %s211
    %p218 = scmp.eq.s32.totalorder %s28, 1
    %p219 = por %p217, %p218
    %p220 = scmp.ne.s32.totalorder %s211, %s212
    %p221 = scmp.eq.s32.totalorder %s28, 0
    %p222 = por %p220, %p221
    %p223 = scmp.ne.s32.totalorder %s211, %s212
    %p224 = scmp.eq.s32.totalorder %s29, 1
    %p225 = por %p223, %p224
    %p227 = scmp.ne.s32.totalorder %s212, %s226
    %p228 = scmp.eq.s32.totalorder %s29, 0
    %p229 = por %p227, %p228
    %s231 = sadd.s32 %s230, 1
    %p234 = scmp.eq.s32.totalorder %s23, 1
    %p235 = scmp.ne.s32.totalorder %s230, %s232
    %p236 = scmp.eq.s32.totalorder %s23, 0
    %p237 = por %p235, %p236
    %p238 = scmp.ne.s32.totalorder %s230, %s232
    %p239 = scmp.eq.s32.totalorder %s28, 1
    %p240 = por %p238, %p239
    %p241 = scmp.ne.s32.totalorder %s232, %s233
    %p242 = scmp.eq.s32.totalorder %s28, 0
    %p243 = por %p241, %p242
    %p244 = scmp.ne.s32.totalorder %s232, %s233
    %p245 = scmp.eq.s32.totalorder %s29, 1
    %p246 = por %p244, %p245
    %p248 = scmp.ne.s32.totalorder %s233, %s247
    %p249 = scmp.eq.s32.totalorder %s29, 0
    %p250 = por %p248, %p249
    %s252 = sadd.s32 %s251, 1
    %p255 = scmp.eq.s32.totalorder %s23, 1
    %p256 = scmp.ne.s32.totalorder %s251, %s253
    %p257 = scmp.eq.s32.totalorder %s23, 0
    %p258 = por %p256, %p257
    %p259 = scmp.ne.s32.totalorder %s251, %s253
    %p260 = scmp.eq.s32.totalorder %s28, 1
    %p261 = por %p259, %p260
    %p262 = scmp.ne.s32.totalorder %s253, %s254
    %p263 = scmp.eq.s32.totalorder %s28, 0
    %p264 = por %p262, %p263
    %p265 = scmp.ne.s32.totalorder %s253, %s254
    %p266 = scmp.eq.s32.totalorder %s29, 1
    %p267 = por %p265, %p266
    %p269 = scmp.ne.s32.totalorder %s254, %s268
    %p270 = scmp.eq.s32.totalorder %s29, 0
    %p271 = por %p269, %p270
    %s273 = sadd.s32 %s272, 1
    %p276 = scmp.eq.s32.totalorder %s23, 1
    %p277 = scmp.ne.s32.totalorder %s272, %s274
    %p278 = scmp.eq.s32.totalorder %s23, 0
    %p279 = por %p277, %p278
    %p280 = scmp.ne.s32.totalorder %s272, %s274
    %p281 = scmp.eq.s32.totalorder %s28, 1
    %p282 = por %p280, %p281
    %p283 = scmp.ne.s32.totalorder %s274, %s275
    %p284 = scmp.eq.s32.totalorder %s28, 0
    %p285 = por %p283, %p284
    %p286 = scmp.ne.s32.totalorder %s274, %s275
    %p287 = scmp.eq.s32.totalorder %s29, 1
    %p288 = por %p286, %p287
    %p290 = scmp.ne.s32.totalorder %s275, %s289
    %p291 = scmp.eq.s32.totalorder %s29, 0
    %p292 = por %p290, %p291
    %s294 = sadd.s32 %s293, 1
    %p297 = scmp.eq.s32.totalorder %s23, 1
    %p298 = scmp.ne.s32.totalorder %s293, %s295
    %p299 = scmp.eq.s32.totalorder %s23, 0
    %p300 = por %p298, %p299
    %p301 = scmp.ne.s32.totalorder %s293, %s295
    %p302 = scmp.eq.s32.totalorder %s28, 1
    %p303 = por %p301, %p302
    %p304 = scmp.ne.s32.totalorder %s295, %s296
    %p305 = scmp.eq.s32.totalorder %s28, 0
    %p306 = por %p304, %p305
    %p307 = scmp.ne.s32.totalorder %s295, %s296
    %p308 = scmp.eq.s32.totalorder %s29, 1
    %p309 = por %p307, %p308
    %p311 = scmp.ne.s32.totalorder %s296, %s310
    %p312 = scmp.eq.s32.totalorder %s29, 0
    %p313 = por %p311, %p312
    %s315 = sadd.s32 %s314, 1
    %p318 = scmp.eq.s32.totalorder %s23, 1
    %p319 = scmp.ne.s32.totalorder %s314, %s316
    %p320 = scmp.eq.s32.totalorder %s23, 0
    %p321 = por %p319, %p320
    %p322 = scmp.ne.s32.totalorder %s314, %s316
    %p323 = scmp.eq.s32.totalorder %s28, 1
    %p324 = por %p322, %p323
    %p325 = scmp.ne.s32.totalorder %s316, %s317
    %p326 = scmp.eq.s32.totalorder %s28, 0
    %p327 = por %p325, %p326
    %p328 = scmp.ne.s32.totalorder %s316, %s317
    %p329 = scmp.eq.s32.totalorder %s29, 1
    %p330 = por %p328, %p329
    %p332 = scmp.ne.s32.totalorder %s317, %s331
    %p333 = scmp.eq.s32.totalorder %s29, 0
    %p334 = por %p332, %p333
    %s336 = sadd.s32 %s335, 1
    %p339 = scmp.eq.s32.totalorder %s23, 1
    %p340 = scmp.ne.s32.totalorder %s335, %s337
    %p341 = scmp.eq.s32.totalorder %s23, 0
    %p342 = por %p340, %p341
    %p343 = scmp.ne.s32.totalorder %s335, %s337
    %p344 = scmp.eq.s32.totalorder %s28, 1
    %p345 = por %p343, %p344
    %p346 = scmp.ne.s32.totalorder %s337, %s338
    %p347 = scmp.eq.s32.totalorder %s28, 0
    %p348 = por %p346, %p347
    %p349 = scmp.ne.s32.totalorder %s337, %s338
    %p350 = scmp.eq.s32.totalorder %s29, 1
    %p351 = por %p349, %p350
    %p353 = scmp.ne.s32.totalorder %s338, %s352
    %p354 = scmp.eq.s32.totalorder %s29, 0
    %p355 = por %p353, %p354
    %s357 = sadd.s32 %s356, 1
    %p360 = scmp.eq.s32.totalorder %s23, 1
    %p361 = scmp.ne.s32.totalorder %s356, %s358
    %p362 = scmp.eq.s32.totalorder %s23, 0
    %p363 = por %p361, %p362
    %p364 = scmp.ne.s32.totalorder %s356, %s358
    %p365 = scmp.eq.s32.totalorder %s28, 1
    %p366 = por %p364, %p365
    %p367 = scmp.ne.s32.totalorder %s358, %s359
    %p368 = scmp.eq.s32.totalorder %s28, 0
    %p369 = por %p367, %p368
    %p370 = scmp.ne.s32.totalorder %s358, %s359
    %p371 = scmp.eq.s32.totalorder %s29, 1
    %p372 = por %p370, %p371
    %p374 = scmp.ne.s32.totalorder %s359, %s373
    %p375 = scmp.eq.s32.totalorder %s29, 0
    %p376 = por %p374, %p375
    %s378 = sadd.s32 %s377, 1
    %p381 = scmp.eq.s32.totalorder %s23, 1
    %p382 = scmp.ne.s32.totalorder %s377, %s379
    %p383 = scmp.eq.s32.totalorder %s23, 0
    %p384 = por %p382, %p383
    %p385 = scmp.ne.s32.totalorder %s377, %s379
    %p386 = scmp.eq.s32.totalorder %s28, 1
    %p387 = por %p385, %p386
    %p388 = scmp.ne.s32.totalorder %s379, %s380
    %p389 = scmp.eq.s32.totalorder %s28, 0
    %p390 = por %p388, %p389
    %p391 = scmp.ne.s32.totalorder %s379, %s380
    %p392 = scmp.eq.s32.totalorder %s29, 1
    %p393 = por %p391, %p392
    %p395 = scmp.ne.s32.totalorder %s380, %s394
    %p396 = scmp.eq.s32.totalorder %s29, 0
    %p397 = por %p395, %p396
    %s398 = ssub.s32 %s23, %s30
    %p399 = scmp.eq.s32.totalorder %s398, 0
    %s401 = sadd.s32 %s400, 1
    %s402 = scalar_select %p399, %s400, %s401
    %p405 = pneg %p399
    %p406 = scmp.eq.s32.totalorder %s23, 1
    %p407 = por %p405, %p406
    %p408 = scmp.ne.s32.totalorder %s400, %s403
    %p409 = scmp.eq.s32.totalorder %s23, 0
    %p410 = por %p408, %p409
    %p411 = scmp.ne.s32.totalorder %s400, %s403
    %p412 = scmp.eq.s32.totalorder %s28, 1
    %p413 = por %p411, %p412
    %p414 = scmp.ne.s32.totalorder %s403, %s404
    %p415 = scmp.eq.s32.totalorder %s28, 0
    %p416 = por %p414, %p415
    %p417 = scmp.ne.s32.totalorder %s403, %s404
    %p418 = scmp.eq.s32.totalorder %s29, 1
    %p419 = por %p417, %p418
    %p421 = scmp.ne.s32.totalorder %s404, %s420
    %p422 = scmp.eq.s32.totalorder %s29, 0
    %p423 = por %p421, %p422
    %p424 = scmp.le.s32.totalorder 1, %s23
    %p425 = scmp.lt.s32.totalorder %s23, 3
    %p426 = pnand %p424, %p425
    %p427 = pneg %p426
    // Predicated region
    $region9: #{_forward_impl.1} parent=5 // pred_check
      _
    $region10: #{_forward_impl.1} parent=5 // pred_check_branch
      %429 = sbr.rel (%p426) target = $region12
    $region11: #{_forward_impl.1} parent=5 // pred_region
      %s430 = ssub.s32 %s23, 1
      // Predicated region
      $region13: #{_forward_impl.1} parent=11 // pred_check
        %p431 = pneg %p70
      $region14: #{_forward_impl.1} parent=11 // pred_check_branch
        %433 = sbr.rel (%p431) target = $region16
      $region15: #{_forward_impl.1} parent=11 // pred_region
        _
      $region16: #{_forward_impl.1} parent=11 // pred_fallthru
        _
      // Predicated region
      $region17: #{_forward_impl.1} parent=11 // pred_check
        %p434 = pneg %p117
      $region18: #{_forward_impl.1} parent=11 // pred_check_branch
        %436 = sbr.rel (%p434) target = $region20
      $region19: #{_forward_impl.1} parent=11 // pred_region
        _
      $region20: #{_forward_impl.1} parent=11 // pred_fallthru
        _
      // Predicated region
      $region21: #{_forward_impl.1} parent=11 // pred_check
        %p437 = pneg %p138
      $region22: #{_forward_impl.1} parent=11 // pred_check_branch
        %439 = sbr.rel (%p437) target = $region24
      $region23: #{_forward_impl.1} parent=11 // pred_region
        _
      $region24: #{_forward_impl.1} parent=11 // pred_fallthru
        _
      // Predicated region
      $region25: #{_forward_impl.1} parent=11 // pred_check
        %p440 = pneg %p159
      $region26: #{_forward_impl.1} parent=11 // pred_check_branch
        %442 = sbr.rel (%p440) target = $region28
      $region27: #{_forward_impl.1} parent=11 // pred_region
        _
      $region28: #{_forward_impl.1} parent=11 // pred_fallthru
        _
      // Predicated region
      $region29: #{_forward_impl.1} parent=11 // pred_check
        %p443 = pneg %p180
      $region30: #{_forward_impl.1} parent=11 // pred_check_branch
        %445 = sbr.rel (%p443) target = $region32
      $region31: #{_forward_impl.1} parent=11 // pred_region
        _
      $region32: #{_forward_impl.1} parent=11 // pred_fallthru
        _
      // Predicated region
      $region33: #{_forward_impl.1} parent=11 // pred_check
        %p446 = pneg %p201
      $region34: #{_forward_impl.1} parent=11 // pred_check_branch
        %448 = sbr.rel (%p446) target = $region36
      $region35: #{_forward_impl.1} parent=11 // pred_region
        _
      $region36: #{_forward_impl.1} parent=11 // pred_fallthru
        _
      // Predicated region
      $region37: #{_forward_impl.1} parent=11 // pred_check
        %p449 = pneg %p222
      $region38: #{_forward_impl.1} parent=11 // pred_check_branch
        %451 = sbr.rel (%p449) target = $region40
      $region39: #{_forward_impl.1} parent=11 // pred_region
        _
      $region40: #{_forward_impl.1} parent=11 // pred_fallthru
        _
      // Predicated region
      $region41: #{_forward_impl.1} parent=11 // pred_check
        %p452 = pneg %p243
      $region42: #{_forward_impl.1} parent=11 // pred_check_branch
        %454 = sbr.rel (%p452) target = $region44
      $region43: #{_forward_impl.1} parent=11 // pred_region
        _
      $region44: #{_forward_impl.1} parent=11 // pred_fallthru
        _
      // Predicated region
      $region45: #{_forward_impl.1} parent=11 // pred_check
        %p455 = pneg %p264
      $region46: #{_forward_impl.1} parent=11 // pred_check_branch
        %457 = sbr.rel (%p455) target = $region48
      $region47: #{_forward_impl.1} parent=11 // pred_region
        _
      $region48: #{_forward_impl.1} parent=11 // pred_fallthru
        _
      // Predicated region
      $region49: #{_forward_impl.1} parent=11 // pred_check
        %p458 = pneg %p285
      $region50: #{_forward_impl.1} parent=11 // pred_check_branch
        %460 = sbr.rel (%p458) target = $region52
      $region51: #{_forward_impl.1} parent=11 // pred_region
        _
      $region52: #{_forward_impl.1} parent=11 // pred_fallthru
        _
      // Predicated region
      $region53: #{_forward_impl.1} parent=11 // pred_check
        %p461 = pneg %p306
      $region54: #{_forward_impl.1} parent=11 // pred_check_branch
        %463 = sbr.rel (%p461) target = $region56
      $region55: #{_forward_impl.1} parent=11 // pred_region
        _
      $region56: #{_forward_impl.1} parent=11 // pred_fallthru
        _
      // Predicated region
      $region57: #{_forward_impl.1} parent=11 // pred_check
        %p464 = pneg %p327
      $region58: #{_forward_impl.1} parent=11 // pred_check_branch
        %466 = sbr.rel (%p464) target = $region60
      $region59: #{_forward_impl.1} parent=11 // pred_region
        _
      $region60: #{_forward_impl.1} parent=11 // pred_fallthru
        _
      // Predicated region
      $region61: #{_forward_impl.1} parent=11 // pred_check
        %p467 = pneg %p348
      $region62: #{_forward_impl.1} parent=11 // pred_check_branch
        %469 = sbr.rel (%p467) target = $region64
      $region63: #{_forward_impl.1} parent=11 // pred_region
        _
      $region64: #{_forward_impl.1} parent=11 // pred_fallthru
        _
      // Predicated region
      $region65: #{_forward_impl.1} parent=11 // pred_check
        %p470 = pneg %p369
      $region66: #{_forward_impl.1} parent=11 // pred_check_branch
        %472 = sbr.rel (%p470) target = $region68
      $region67: #{_forward_impl.1} parent=11 // pred_region
        _
      $region68: #{_forward_impl.1} parent=11 // pred_fallthru
        _
      // Predicated region
      $region69: #{_forward_impl.1} parent=11 // pred_check
        %p473 = pneg %p390
      $region70: #{_forward_impl.1} parent=11 // pred_check_branch
        %475 = sbr.rel (%p473) target = $region72
      $region71: #{_forward_impl.1} parent=11 // pred_region
        _
      $region72: #{_forward_impl.1} parent=11 // pred_fallthru
        _
    $region12: #{_forward_impl.1} parent=5 // pred_fallthru
      _
    %p476 = scmp.lt.s32.totalorder %s23, 2
    // Predicated region
    $region73: #{_forward_impl.1} parent=5 // pred_check
      %p477 = pneg %p476
    $region74: #{_forward_impl.1} parent=5 // pred_check_branch
      %479 = sbr.rel (%p477) target = $region76
    $region75: #{_forward_impl.1} parent=5 // pred_region
      // Predicated region
      $region77: #{_forward_impl.1} parent=75 // pred_check
        %p480 = pneg %p43
      $region78: #{_forward_impl.1} parent=75 // pred_check_branch
        %482 = sbr.rel (%p480) target = $region80
      $region79: #{_forward_impl.1} parent=75 // pred_region
        %p483 = scmp.lt.s32.totalorder %s23, 1
        %s484 = scalar_select %p483, %s23, 1
        %s485 = smul.addr %s484, 8
        %s486 = scalar_lea.vmem %s0, %s485
      $region80: #{_forward_impl.1} parent=75 // pred_fallthru
        _
      // Predicated region
      $region81: #{_forward_impl.1} parent=75 // pred_check
        %p487 = pneg %p90
      $region82: #{_forward_impl.1} parent=75 // pred_check_branch
        %489 = sbr.rel (%p487) target = $region84
      $region83: #{_forward_impl.1} parent=75 // pred_region
        %p490 = scmp.lt.s32.totalorder %s23, 1
        %s491 = scalar_select %p490, %s23, 1
        %s492 = smul.addr %s491, 8
        %s493 = scalar_lea.vmem %s2, %s492
      $region84: #{_forward_impl.1} parent=75 // pred_fallthru
        _
    $region76: #{_forward_impl.1} parent=5 // pred_fallthru
      _
    %p494 = scmp.le.s32.totalorder 1, %s23
    %p495 = scmp.lt.s32.totalorder %s23, 3
    %p496 = pnand %p494, %p495
    %p497 = pneg %p496
    // Predicated region
    $region85: #{_forward_impl.1} parent=5 // pred_check
      _
    $region86: #{_forward_impl.1} parent=5 // pred_check_branch
      %499 = sbr.rel (%p496) target = $region88
    $region87: #{_forward_impl.1} parent=5 // pred_region
      %s500 = ssub.s32 %s23, 1
      %p501 = scmp.lt.s32.totalorder %s28, 1
      %s502 = scalar_select %p501, %s28, 1
      %s503 = smul.addr %s502, 8
      %s504 = scalar_lea.vmem %s0, %s503
      %p505 = pneg %p49
      %p506 = pneg %p46
      %p507 = pneg %p70
      %p508 = pneg %p67
      %p509 = scmp.lt.s32.totalorder %s28, 1
      %s510 = scalar_select %p509, %s28, 1
      %s511 = smul.addr %s510, 8
      %s512 = scalar_lea.vmem %s2, %s511
      %p513 = pneg %p96
      %p514 = pneg %p93
      %p515 = pneg %p117
      %p516 = pneg %p114
      %p517 = pneg %p138
      %p518 = pneg %p135
      %p519 = pneg %p159
      %p520 = pneg %p156
      %p521 = pneg %p180
      %p522 = pneg %p177
      %p523 = pneg %p201
      %p524 = pneg %p198
      %p525 = pneg %p222
      %p526 = pneg %p219
      %p527 = pneg %p243
      %p528 = pneg %p240
      %p529 = pneg %p264
      %p530 = pneg %p261
      %p531 = pneg %p285
      %p532 = pneg %p282
      %p533 = pneg %p306
      %p534 = pneg %p303
      %p535 = pneg %p327
      %p536 = pneg %p324
      %p537 = pneg %p348
      %p538 = pneg %p345
      %p539 = pneg %p369
      %p540 = pneg %p366
      %p541 = pneg %p390
      %p542 = pneg %p387
      %p543 = pneg %p416
      %p544 = pneg %p413
      %p545 = scmp.lt.s32.totalorder %s28, 1
      %s546 = scalar_select %p545, %s28, 1
      %s547 = smul.addr %s546, 8
      %s548 = scalar_lea.vmem %s17, %s547
      %p549 = scmp.lt.s32.totalorder %s28, 1
      %s550 = scalar_select %p549, %s28, 1
      %s551 = smul.addr %s550, 8
      %s552 = scalar_lea.vmem %s0, %s551
      %p553 = scmp.lt.s32.totalorder %s28, 1
      %s554 = scalar_select %p553, %s28, 1
      %s555 = smul.addr %s554, 8
      %s556 = scalar_lea.vmem %s2, %s555
      %p557 = scmp.lt.s32.totalorder %s28, 1
      %s558 = scalar_select %p557, %s28, 1
      %s559 = smul.addr %s558, 8
      %s560 = scalar_lea.vmem %s17, %s559
      %v561 = vld [vmem:[%s1] sm:$0xff]
      %v562 = vld [vmem:[%s556] sm:$0xff]
      %v563 = vld [vmem:[%s552] sm:$0xff]
      %v564 = vld [vmem:[%s3] sm:$0xff]
      %v565 = vld [vmem:[%s3 + $0x8] sm:$0xff]
      %v566 = vld [vmem:[%s3 + $0x10] sm:$0xff]
      %v567 = vld [vmem:[%s3 + $0x18] sm:$0xff]
      %v568 = vld [vmem:[%s3 + $0x20] sm:$0xff]
      %v569 = vld [vmem:[%s3 + $0x28] sm:$0xff]
      %v570 = vld [vmem:[%s3 + $0x30] sm:$0xff]
      %v571 = vld [vmem:[%s3 + $0x38] sm:$0xff]
      %v572 = vld [vmem:[%s3 + $0x40] sm:$0xff]
      %v573 = vld [vmem:[%s3 + $0x48] sm:$0xff]
      %v574 = vld [vmem:[%s3 + $0x50] sm:$0xff]
      %v575 = vld [vmem:[%s3 + $0x58] sm:$0xff]
      %v576 = vld [vmem:[%s3 + $0x60] sm:$0xff]
      %v577 = vld [vmem:[%s3 + $0x68] sm:$0xff]
      %v578 = vld [vmem:[%s3 + $0x70] sm:$0xff]
      %v579 = vld [vmem:[%s3 + $0x78] sm:$0xff]
      %v580 = vld [vmem:[%s4] sm:$0x1]
      %v582 = vlaneseq
      %v583 = vshrl.u32 %v582, 7
      %v584 = vsub.s32 0, %v583
      %v585 = vrot.slane %v580, %v584
      %587 = vmatprep.subr.mxu0 0.0
      %588 = vmatpush1.msra.mxu0 %v564
      %589 = vmatprep.subr.mxu0 0.0
      %590 = vmatpush1.msra.mxu0 %v565
      %591 = vmatprep.subr.mxu0 0.0
      %592 = vmatpush1.msra.mxu0 %v566
      %593 = vmatprep.subr.mxu0 0.0
      %594 = vmatpush1.msra.mxu0 %v567
      %595 = vmatprep.subr.mxu0 0.0
      %596 = vmatpush1.msra.mxu0 %v568
      %597 = vmatprep.subr.mxu0 0.0
      %598 = vmatpush1.msra.mxu0 %v569
      %599 = vmatprep.subr.mxu0 0.0
      %600 = vmatpush1.msra.mxu0 %v570
      %601 = vmatprep.subr.mxu0 0.0
      %602 = vmatpush1.msra.mxu0 %v571
      %603 = vmatprep.subr.mxu0 0.0
      %604 = vmatpush1.msra.mxu0 %v572
      %605 = vmatprep.subr.mxu0 0.0
      %606 = vmatpush1.msra.mxu0 %v573
      %607 = vmatprep.subr.mxu0 0.0
      %608 = vmatpush1.msra.mxu0 %v574
      %609 = vmatprep.subr.mxu0 0.0
      %610 = vmatpush1.msra.mxu0 %v575
      %611 = vmatprep.subr.mxu0 0.0
      %612 = vmatpush1.msra.mxu0 %v576
      %613 = vmatprep.subr.mxu0 0.0
      %614 = vmatpush1.msra.mxu0 %v577
      %615 = vmatprep.subr.mxu0 0.0
      %616 = vmatpush1.msra.mxu0 %v578
      %617 = vmatprep.subr.mxu0 0.0
      %618 = vmatpush1.msra.mxu0 %v579
      %619 = vmatprep.subr.mxu0 0.0
      %620 = vmatpush1.msra.mxu0 0.0
      %621 = vmatprep.subr.mxu0 0.0
      %622 = vmatpush1.msra.mxu0 0.0
      %623 = vmatprep.subr.mxu0 0.0
      %624 = vmatpush1.msra.mxu0 0.0
      %625 = vmatprep.subr.mxu0 0.0
      %626 = vmatpush1.msra.mxu0 0.0
      %627 = vmatprep.subr.mxu0 0.0
      %628 = vmatpush1.msra.mxu0 0.0
      %629 = vmatprep.subr.mxu0 0.0
      %630 = vmatpush1.msra.mxu0 0.0
      %631 = vmatprep.subr.mxu0 0.0
      %632 = vmatpush1.msra.mxu0 0.0
      %633 = vmatprep.subr.mxu0 0.0
      %634 = vmatpush1.msra.mxu0 0.0
      %635 = vmatprep.subr.mxu0 0.0
      %636 = vmatpush1.msra.mxu0 0.0
      %637 = vmatprep.subr.mxu0 0.0
      %638 = vmatpush1.msra.mxu0 0.0
      %639 = vmatprep.subr.mxu0 0.0
      %640 = vmatpush1.msra.mxu0 0.0
      %641 = vmatprep.subr.mxu0 0.0
      %642 = vmatpush1.msra.mxu0 0.0
      %643 = vmatprep.subr.mxu0 0.0
      %644 = vmatpush1.msra.mxu0 0.0
      %645 = vmatprep.subr.mxu0 0.0
      %646 = vmatpush1.msra.mxu0 0.0
      %647 = vmatprep.subr.mxu0 0.0
      %648 = vmatpush1.msra.mxu0 0.0
      %649 = vmatprep.subr.mxu0 0.0
      %650 = vmatpush1.msra.mxu0 0.0
      %651 = vmatprep.mubr.f32.mxu0 0.0
      %652 = vmatmul.mubr.f32.gmra.mrb[0].mxu0 %v563
      %v653 = vpop.f32.mrb[0].mxu0
      %v654 = vadd.f32 %v585, %v653
      %v655 = vpop.f32.mrb[0].mxu0
      %656 = vdwg.mxu0
      %658 = vset.pattern.permute.xlu0 0
      %659 = vperm.xlu0 %658, %v562
      %v660 = vpop.permute.xlu0 %659
      %v662 = vmul.f32 %v654, %v660
      %vm663 = vcmask 64512
      %v665 = vsel %vm663, %v561, 0
      %667 = vmatprep.subr.mxu0 0.0
      %668 = vmatpush1.msra.mxu0 %v662
      %669 = vmatprep.subr.mxu0 0.0
      %670 = vmatpush1.msra.mxu0 0.0
      %671 = vmatprep.subr.mxu0 0.0
      %672 = vmatpush1.msra.mxu0 0.0
      %673 = vmatprep.subr.mxu0 0.0
      %674 = vmatpush1.msra.mxu0 0.0
      %675 = vmatprep.subr.mxu0 0.0
      %676 = vmatpush1.msra.mxu0 0.0
      %677 = vmatprep.subr.mxu0 0.0
      %678 = vmatpush1.msra.mxu0 0.0
      %679 = vmatprep.subr.mxu0 0.0
      %680 = vmatpush1.msra.mxu0 0.0
      %681 = vmatprep.subr.mxu0 0.0
      %682 = vmatpush1.msra.mxu0 0.0
      %683 = vmatprep.subr.mxu0 0.0
      %684 = vmatpush1.msra.mxu0 0.0
      %685 = vmatprep.subr.mxu0 0.0
      %686 = vmatpush1.msra.mxu0 0.0
      %687 = vmatprep.subr.mxu0 0.0
      %688 = vmatpush1.msra.mxu0 0.0
      %689 = vmatprep.subr.mxu0 0.0
      %690 = vmatpush1.msra.mxu0 0.0
      %691 = vmatprep.subr.mxu0 0.0
      %692 = vmatpush1.msra.mxu0 0.0
      %693 = vmatprep.subr.mxu0 0.0
      %694 = vmatpush1.msra.mxu0 0.0
      %695 = vmatprep.subr.mxu0 0.0
      %696 = vmatpush1.msra.mxu0 0.0
      %697 = vmatprep.subr.mxu0 0.0
      %698 = vmatpush1.msra.mxu0 0.0
      %699 = vmatprep.subr.mxu0 0.0
      %700 = vmatpush1.msra.mxu0 0.0
      %701 = vmatprep.subr.mxu0 0.0
      %702 = vmatpush1.msra.mxu0 0.0
      %703 = vmatprep.subr.mxu0 0.0
      %704 = vmatpush1.msra.mxu0 0.0
      %705 = vmatprep.subr.mxu0 0.0
      %706 = vmatpush1.msra.mxu0 0.0
      %707 = vmatprep.subr.mxu0 0.0
      %708 = vmatpush1.msra.mxu0 0.0
      %709 = vmatprep.subr.mxu0 0.0
      %710 = vmatpush1.msra.mxu0 0.0
      %711 = vmatprep.subr.mxu0 0.0
      %712 = vmatpush1.msra.mxu0 0.0
      %713 = vmatprep.subr.mxu0 0.0
      %714 = vmatpush1.msra.mxu0 0.0
      %715 = vmatprep.subr.mxu0 0.0
      %716 = vmatpush1.msra.mxu0 0.0
      %717 = vmatprep.subr.mxu0 0.0
      %718 = vmatpush1.msra.mxu0 0.0
      %719 = vmatprep.subr.mxu0 0.0
      %720 = vmatpush1.msra.mxu0 0.0
      %721 = vmatprep.subr.mxu0 0.0
      %722 = vmatpush1.msra.mxu0 0.0
      %723 = vmatprep.subr.mxu0 0.0
      %724 = vmatpush1.msra.mxu0 0.0
      %725 = vmatprep.subr.mxu0 0.0
      %726 = vmatpush1.msra.mxu0 0.0
      %727 = vmatprep.subr.mxu0 0.0
      %728 = vmatpush1.msra.mxu0 0.0
      %729 = vmatprep.subr.mxu0 0.0
      %730 = vmatpush1.msra.mxu0 0.0
      %731 = vmatprep.mubr.f32.mxu0 0.0
      %732 = vmatmul.mubr.f32.gmra.mrb[0].mxu0 %v665
      %v733 = vpop.f32.mrb[0].mxu0
      %v734 = vadd.f32 0.0, %v733
      %v735 = vpop.f32.mrb[0].mxu0
      %736 = vdwg.mxu0
      %v737 = vld [vmem:[%s5] sm:$0xff]
      %v738 = vld [vmem:[%s5 + $0x8] sm:$0xff]
      %v739 = vld [vmem:[%s5 + $0x10] sm:$0xff]
      %v740 = vld [vmem:[%s5 + $0x18] sm:$0xff]
      %v741 = vld [vmem:[%s5 + $0x20] sm:$0xff]
      %v742 = vld [vmem:[%s5 + $0x28] sm:$0xff]
      %v743 = vld [vmem:[%s5 + $0x30] sm:$0xff]
      %v744 = vld [vmem:[%s5 + $0x38] sm:$0xff]
      %v745 = vld [vmem:[%s5 + $0x40] sm:$0xff]
      %v746 = vld [vmem:[%s5 + $0x48] sm:$0xff]
      %v747 = vld [vmem:[%s5 + $0x50] sm:$0xff]
      %v748 = vld [vmem:[%s5 + $0x58] sm:$0xff]
      %v749 = vld [vmem:[%s5 + $0x60] sm:$0xff]
      %v750 = vld [vmem:[%s5 + $0x68] sm:$0xff]
      %v751 = vld [vmem:[%s5 + $0x70] sm:$0xff]
      %v752 = vld [vmem:[%s5 + $0x78] sm:$0xff]
      %v753 = vld [vmem:[%s5 + $0x80] sm:$0xff]
      %v754 = vld [vmem:[%s5 + $0x88] sm:$0xff]
      %v755 = vld [vmem:[%s5 + $0x90] sm:$0xff]
      %v756 = vld [vmem:[%s5 + $0x98] sm:$0xff]
      %v757 = vld [vmem:[%s5 + $0xa0] sm:$0xff]
      %v758 = vld [vmem:[%s5 + $0xa8] sm:$0xff]
      %v759 = vld [vmem:[%s5 + $0xb0] sm:$0xff]
      %v760 = vld [vmem:[%s5 + $0xb8] sm:$0xff]
      %v761 = vld [vmem:[%s5 + $0xc0] sm:$0xff]
      %v762 = vld [vmem:[%s5 + $0xc8] sm:$0xff]
      %v763 = vld [vmem:[%s5 + $0xd0] sm:$0xff]
      %v764 = vld [vmem:[%s5 + $0xd8] sm:$0xff]
      %v765 = vld [vmem:[%s5 + $0xe0] sm:$0xff]
      %v766 = vld [vmem:[%s5 + $0xe8] sm:$0xff]
      %v767 = vld [vmem:[%s5 + $0xf0] sm:$0xff]
      %v768 = vld [vmem:[%s5 + $0xf8] sm:$0xff]
      %v769 = vld [vmem:[%s6] sm:$0x1]
      %v771 = vlaneseq
      %v772 = vshrl.u32 %v771, 7
      %v773 = vsub.s32 0, %v772
      %v774 = vrot.slane %v769, %v773
      %776 = vmatprep.subr.mxu0 0.0
      %777 = vmatpush1.msra.mxu0 %v737
      %778 = vmatprep.subr.mxu0 0.0
      %779 = vmatpush1.msra.mxu0 %v738
      %780 = vmatprep.subr.mxu0 0.0
      %781 = vmatpush1.msra.mxu0 %v739
      %782 = vmatprep.subr.mxu0 0.0
      %783 = vmatpush1.msra.mxu0 %v740
      %784 = vmatprep.subr.mxu0 0.0
      %785 = vmatpush1.msra.mxu0 %v741
      %786 = vmatprep.subr.mxu0 0.0
      %787 = vmatpush1.msra.mxu0 %v742
      %788 = vmatprep.subr.mxu0 0.0
      %789 = vmatpush1.msra.mxu0 %v743
      %790 = vmatprep.subr.mxu0 0.0
      %791 = vmatpush1.msra.mxu0 %v744
      %792 = vmatprep.subr.mxu0 0.0
      %793 = vmatpush1.msra.mxu0 %v745
      %794 = vmatprep.subr.mxu0 0.0
      %795 = vmatpush1.msra.mxu0 %v746
      %796 = vmatprep.subr.mxu0 0.0
      %797 = vmatpush1.msra.mxu0 %v747
      %798 = vmatprep.subr.mxu0 0.0
      %799 = vmatpush1.msra.mxu0 %v748
      %800 = vmatprep.subr.mxu0 0.0
      %801 = vmatpush1.msra.mxu0 %v749
      %802 = vmatprep.subr.mxu0 0.0
      %803 = vmatpush1.msra.mxu0 %v750
      %804 = vmatprep.subr.mxu0 0.0
      %805 = vmatpush1.msra.mxu0 %v751
      %806 = vmatprep.subr.mxu0 0.0
      %807 = vmatpush1.msra.mxu0 %v752
      %808 = vmatprep.subr.mxu0 0.0
      %809 = vmatpush1.msra.mxu0 %v753
      %810 = vmatprep.subr.mxu0 0.0
      %811 = vmatpush1.msra.mxu0 %v754
      %812 = vmatprep.subr.mxu0 0.0
      %813 = vmatpush1.msra.mxu0 %v755
      %814 = vmatprep.subr.mxu0 0.0
      %815 = vmatpush1.msra.mxu0 %v756
      %816 = vmatprep.subr.mxu0 0.0
      %817 = vmatpush1.msra.mxu0 %v757
      %818 = vmatprep.subr.mxu0 0.0
      %819 = vmatpush1.msra.mxu0 %v758
      %820 = vmatprep.subr.mxu0 0.0
      %821 = vmatpush1.msra.mxu0 %v759
      %822 = vmatprep.subr.mxu0 0.0
      %823 = vmatpush1.msra.mxu0 %v760
      %824 = vmatprep.subr.mxu0 0.0
      %825 = vmatpush1.msra.mxu0 %v761
      %826 = vmatprep.subr.mxu0 0.0
      %827 = vmatpush1.msra.mxu0 %v762
      %828 = vmatprep.subr.mxu0 0.0
      %829 = vmatpush1.msra.mxu0 %v763
      %830 = vmatprep.subr.mxu0 0.0
      %831 = vmatpush1.msra.mxu0 %v764
      %832 = vmatprep.subr.mxu0 0.0
      %833 = vmatpush1.msra.mxu0 %v765
      %834 = vmatprep.subr.mxu0 0.0
      %835 = vmatpush1.msra.mxu0 %v766
      %836 = vmatprep.subr.mxu0 0.0
      %837 = vmatpush1.msra.mxu0 %v767
      %838 = vmatprep.subr.mxu0 0.0
      %839 = vmatpush1.msra.mxu0 %v768
      %840 = vmatprep.mubr.f32.mxu0 %v662
      %841 = vmatmul.mubr.f32.gmra.mrb[0].mxu0 %v734
      %v842 = vpop.f32.mrb[0].mxu0
      %v843 = vadd.f32 %v774, %v842
      %v844 = vpop.f32.mrb[0].mxu0
      %845 = vdwg.mxu0
      %v846 = vmax.f32 %v843, 0.0
      %v847 = vmul.f32 %v846, %v660
      %848 = vmatprep.subr.mxu0 0.0
      %849 = vmatpush1.msra.mxu0 %v847
      %850 = vmatprep.subr.mxu0 0.0
      %851 = vmatpush1.msra.mxu0 0.0
      %852 = vmatprep.subr.mxu0 0.0
      %853 = vmatpush1.msra.mxu0 0.0
      %854 = vmatprep.subr.mxu0 0.0
      %855 = vmatpush1.msra.mxu0 0.0
      %856 = vmatprep.subr.mxu0 0.0
      %857 = vmatpush1.msra.mxu0 0.0
      %858 = vmatprep.subr.mxu0 0.0
      %859 = vmatpush1.msra.mxu0 0.0
      %860 = vmatprep.subr.mxu0 0.0
      %861 = vmatpush1.msra.mxu0 0.0
      %862 = vmatprep.subr.mxu0 0.0
      %863 = vmatpush1.msra.mxu0 0.0
      %864 = vmatprep.subr.mxu0 0.0
      %865 = vmatpush1.msra.mxu0 0.0
      %866 = vmatprep.subr.mxu0 0.0
      %867 = vmatpush1.msra.mxu0 0.0
      %868 = vmatprep.subr.mxu0 0.0
      %869 = vmatpush1.msra.mxu0 0.0
      %870 = vmatprep.subr.mxu0 0.0
      %871 = vmatpush1.msra.mxu0 0.0
      %872 = vmatprep.subr.mxu0 0.0
      %873 = vmatpush1.msra.mxu0 0.0
      %874 = vmatprep.subr.mxu0 0.0
      %875 = vmatpush1.msra.mxu0 0.0
      %876 = vmatprep.subr.mxu0 0.0
      %877 = vmatpush1.msra.mxu0 0.0
      %878 = vmatprep.subr.mxu0 0.0
      %879 = vmatpush1.msra.mxu0 0.0
      %880 = vmatprep.subr.mxu0 0.0
      %881 = vmatpush1.msra.mxu0 0.0
      %882 = vmatprep.subr.mxu0 0.0
      %883 = vmatpush1.msra.mxu0 0.0
      %884 = vmatprep.subr.mxu0 0.0
      %885 = vmatpush1.msra.mxu0 0.0
      %886 = vmatprep.subr.mxu0 0.0
      %887 = vmatpush1.msra.mxu0 0.0
      %888 = vmatprep.subr.mxu0 0.0
      %889 = vmatpush1.msra.mxu0 0.0
      %890 = vmatprep.subr.mxu0 0.0
      %891 = vmatpush1.msra.mxu0 0.0
      %892 = vmatprep.subr.mxu0 0.0
      %893 = vmatpush1.msra.mxu0 0.0
      %894 = vmatprep.subr.mxu0 0.0
      %895 = vmatpush1.msra.mxu0 0.0
      %896 = vmatprep.subr.mxu0 0.0
      %897 = vmatpush1.msra.mxu0 0.0
      %898 = vmatprep.subr.mxu0 0.0
      %899 = vmatpush1.msra.mxu0 0.0
      %900 = vmatprep.subr.mxu0 0.0
      %901 = vmatpush1.msra.mxu0 0.0
      %902 = vmatprep.subr.mxu0 0.0
      %903 = vmatpush1.msra.mxu0 0.0
      %904 = vmatprep.subr.mxu0 0.0
      %905 = vmatpush1.msra.mxu0 0.0
      %906 = vmatprep.subr.mxu0 0.0
      %907 = vmatpush1.msra.mxu0 0.0
      %908 = vmatprep.subr.mxu0 0.0
      %909 = vmatpush1.msra.mxu0 0.0
      %910 = vmatprep.subr.mxu0 0.0
      %911 = vmatpush1.msra.mxu0 0.0
      %912 = vmatprep.mubr.f32.mxu0 0.0
      %913 = vmatmul.mubr.f32.gmra.mrb[0].mxu0 %v665
      %v914 = vpop.f32.mrb[0].mxu0
      %v915 = vadd.f32 0.0, %v914
      %v916 = vpop.f32.mrb[0].mxu0
      %917 = vdwg.mxu0
      %v918 = vld [vmem:[%s7] sm:$0xff]
      %v919 = vld [vmem:[%s7 + $0x8] sm:$0xff]
      %v920 = vld [vmem:[%s7 + $0x10] sm:$0xff]
      %v921 = vld [vmem:[%s7 + $0x18] sm:$0xff]
      %v922 = vld [vmem:[%s7 + $0x20] sm:$0xff]
      %v923 = vld [vmem:[%s7 + $0x28] sm:$0xff]
      %v924 = vld [vmem:[%s7 + $0x30] sm:$0xff]
      %v925 = vld [vmem:[%s7 + $0x38] sm:$0xff]
      %v926 = vld [vmem:[%s7 + $0x40] sm:$0xff]
      %v927 = vld [vmem:[%s7 + $0x48] sm:$0xff]
      %v928 = vld [vmem:[%s7 + $0x50] sm:$0xff]
      %v929 = vld [vmem:[%s7 + $0x58] sm:$0xff]
      %v930 = vld [vmem:[%s7 + $0x60] sm:$0xff]
      %v931 = vld [vmem:[%s7 + $0x68] sm:$0xff]
      %v932 = vld [vmem:[%s7 + $0x70] sm:$0xff]
      %v933 = vld [vmem:[%s7 + $0x78] sm:$0xff]
      %v934 = vld [vmem:[%s7 + $0x80] sm:$0xff]
      %v935 = vld [vmem:[%s7 + $0x88] sm:$0xff]
      %v936 = vld [vmem:[%s7 + $0x90] sm:$0xff]
      %v937 = vld [vmem:[%s7 + $0x98] sm:$0xff]
      %v938 = vld [vmem:[%s7 + $0xa0] sm:$0xff]
      %v939 = vld [vmem:[%s7 + $0xa8] sm:$0xff]
      %v940 = vld [vmem:[%s7 + $0xb0] sm:$0xff]
      %v941 = vld [vmem:[%s7 + $0xb8] sm:$0xff]
      %v942 = vld [vmem:[%s7 + $0xc0] sm:$0xff]
      %v943 = vld [vmem:[%s7 + $0xc8] sm:$0xff]
      %v944 = vld [vmem:[%s7 + $0xd0] sm:$0xff]
      %v945 = vld [vmem:[%s7 + $0xd8] sm:$0xff]
      %v946 = vld [vmem:[%s7 + $0xe0] sm:$0xff]
      %v947 = vld [vmem:[%s7 + $0xe8] sm:$0xff]
      %v948 = vld [vmem:[%s7 + $0xf0] sm:$0xff]
      %v949 = vld [vmem:[%s7 + $0xf8] sm:$0xff]
      %v950 = vld [vmem:[%s8] sm:$0x1]
      %v952 = vlaneseq
      %v953 = vshrl.u32 %v952, 7
      %v954 = vsub.s32 0, %v953
      %v955 = vrot.slane %v950, %v954
      %957 = vmatprep.subr.mxu0 0.0
      %958 = vmatpush1.msra.mxu0 %v918
      %959 = vmatprep.subr.mxu0 0.0
      %960 = vmatpush1.msra.mxu0 %v919
      %961 = vmatprep.subr.mxu0 0.0
      %962 = vmatpush1.msra.mxu0 %v920
      %963 = vmatprep.subr.mxu0 0.0
      %964 = vmatpush1.msra.mxu0 %v921
      %965 = vmatprep.subr.mxu0 0.0
      %966 = vmatpush1.msra.mxu0 %v922
      %967 = vmatprep.subr.mxu0 0.0
      %968 = vmatpush1.msra.mxu0 %v923
      %969 = vmatprep.subr.mxu0 0.0
      %970 = vmatpush1.msra.mxu0 %v924
      %971 = vmatprep.subr.mxu0 0.0
      %972 = vmatpush1.msra.mxu0 %v925
      %973 = vmatprep.subr.mxu0 0.0
      %974 = vmatpush1.msra.mxu0 %v926
      %975 = vmatprep.subr.mxu0 0.0
      %976 = vmatpush1.msra.mxu0 %v927
      %977 = vmatprep.subr.mxu0 0.0
      %978 = vmatpush1.msra.mxu0 %v928
      %979 = vmatprep.subr.mxu0 0.0
      %980 = vmatpush1.msra.mxu0 %v929
      %981 = vmatprep.subr.mxu0 0.0
      %982 = vmatpush1.msra.mxu0 %v930
      %983 = vmatprep.subr.mxu0 0.0
      %984 = vmatpush1.msra.mxu0 %v931
      %985 = vmatprep.subr.mxu0 0.0
      %986 = vmatpush1.msra.mxu0 %v932
      %987 = vmatprep.subr.mxu0 0.0
      %988 = vmatpush1.msra.mxu0 %v933
      %989 = vmatprep.subr.mxu0 0.0
      %990 = vmatpush1.msra.mxu0 %v934
      %991 = vmatprep.subr.mxu0 0.0
      %992 = vmatpush1.msra.mxu0 %v935
      %993 = vmatprep.subr.mxu0 0.0
      %994 = vmatpush1.msra.mxu0 %v936
      %995 = vmatprep.subr.mxu0 0.0
      %996 = vmatpush1.msra.mxu0 %v937
      %997 = vmatprep.subr.mxu0 0.0
      %998 = vmatpush1.msra.mxu0 %v938
      %999 = vmatprep.subr.mxu0 0.0
      %1000 = vmatpush1.msra.mxu0 %v939
      %1001 = vmatprep.subr.mxu0 0.0
      %1002 = vmatpush1.msra.mxu0 %v940
      %1003 = vmatprep.subr.mxu0 0.0
      %1004 = vmatpush1.msra.mxu0 %v941
      %1005 = vmatprep.subr.mxu0 0.0
      %1006 = vmatpush1.msra.mxu0 %v942
      %1007 = vmatprep.subr.mxu0 0.0
      %1008 = vmatpush1.msra.mxu0 %v943
      %1009 = vmatprep.subr.mxu0 0.0
      %1010 = vmatpush1.msra.mxu0 %v944
      %1011 = vmatprep.subr.mxu0 0.0
      %1012 = vmatpush1.msra.mxu0 %v945
      %1013 = vmatprep.subr.mxu0 0.0
      %1014 = vmatpush1.msra.mxu0 %v946
      %1015 = vmatprep.subr.mxu0 0.0
      %1016 = vmatpush1.msra.mxu0 %v947
      %1017 = vmatprep.subr.mxu0 0.0
      %1018 = vmatpush1.msra.mxu0 %v948
      %1019 = vmatprep.subr.mxu0 0.0
      %1020 = vmatpush1.msra.mxu0 %v949
      %1021 = vmatprep.mubr.f32.mxu0 %v847
      %1022 = vmatmul.mubr.f32.gmra.mrb[0].mxu0 %v915
      %v1023 = vpop.f32.mrb[0].mxu0
      %v1024 = vadd.f32 %v955, %v1023
      %v1025 = vpop.f32.mrb[0].mxu0
      %1026 = vdwg.mxu0
      %v1027 = vmax.f32 %v1024, 0.0
      %v1028 = vmul.f32 %v1027, %v660
      %1029 = vmatprep.subr.mxu0 0.0
      %1030 = vmatpush1.msra.mxu0 %v1028
      %1031 = vmatprep.subr.mxu0 0.0
      %1032 = vmatpush1.msra.mxu0 0.0
      %1033 = vmatprep.subr.mxu0 0.0
      %1034 = vmatpush1.msra.mxu0 0.0
      %1035 = vmatprep.subr.mxu0 0.0
      %1036 = vmatpush1.msra.mxu0 0.0
      %1037 = vmatprep.subr.mxu0 0.0
      %1038 = vmatpush1.msra.mxu0 0.0
      %1039 = vmatprep.subr.mxu0 0.0
      %1040 = vmatpush1.msra.mxu0 0.0
      %1041 = vmatprep.subr.mxu0 0.0
      %1042 = vmatpush1.msra.mxu0 0.0
      %1043 = vmatprep.subr.mxu0 0.0
      %1044 = vmatpush1.msra.mxu0 0.0
      %1045 = vmatprep.subr.mxu0 0.0
      %1046 = vmatpush1.msra.mxu0 0.0
      %1047 = vmatprep.subr.mxu0 0.0
      %1048 = vmatpush1.msra.mxu0 0.0
      %1049 = vmatprep.subr.mxu0 0.0
      %1050 = vmatpush1.msra.mxu0 0.0
      %1051 = vmatprep.subr.mxu0 0.0
      %1052 = vmatpush1.msra.mxu0 0.0
      %1053 = vmatprep.subr.mxu0 0.0
      %1054 = vmatpush1.msra.mxu0 0.0
      %1055 = vmatprep.subr.mxu0 0.0
      %1056 = vmatpush1.msra.mxu0 0.0
      %1057 = vmatprep.subr.mxu0 0.0
      %1058 = vmatpush1.msra.mxu0 0.0
      %1059 = vmatprep.subr.mxu0 0.0
      %1060 = vmatpush1.msra.mxu0 0.0
      %1061 = vmatprep.subr.mxu0 0.0
      %1062 = vmatpush1.msra.mxu0 0.0
      %1063 = vmatprep.subr.mxu0 0.0
      %1064 = vmatpush1.msra.mxu0 0.0
      %1065 = vmatprep.subr.mxu0 0.0
      %1066 = vmatpush1.msra.mxu0 0.0
      %1067 = vmatprep.subr.mxu0 0.0
      %1068 = vmatpush1.msra.mxu0 0.0
      %1069 = vmatprep.subr.mxu0 0.0
      %1070 = vmatpush1.msra.mxu0 0.0
      %1071 = vmatprep.subr.mxu0 0.0
      %1072 = vmatpush1.msra.mxu0 0.0
      %1073 = vmatprep.subr.mxu0 0.0
      %1074 = vmatpush1.msra.mxu0 0.0
      %1075 = vmatprep.subr.mxu0 0.0
      %1076 = vmatpush1.msra.mxu0 0.0
      %1077 = vmatprep.subr.mxu0 0.0
      %1078 = vmatpush1.msra.mxu0 0.0
      %1079 = vmatprep.subr.mxu0 0.0
      %1080 = vmatpush1.msra.mxu0 0.0
      %1081 = vmatprep.subr.mxu0 0.0
      %1082 = vmatpush1.msra.mxu0 0.0
      %1083 = vmatprep.subr.mxu0 0.0
      %1084 = vmatpush1.msra.mxu0 0.0
      %1085 = vmatprep.subr.mxu0 0.0
      %1086 = vmatpush1.msra.mxu0 0.0
      %1087 = vmatprep.subr.mxu0 0.0
      %1088 = vmatpush1.msra.mxu0 0.0
      %1089 = vmatprep.subr.mxu0 0.0
      %1090 = vmatpush1.msra.mxu0 0.0
      %1091 = vmatprep.subr.mxu0 0.0
      %1092 = vmatpush1.msra.mxu0 0.0
      %1093 = vmatprep.mubr.f32.mxu0 0.0
      %1094 = vmatmul.mubr.f32.gmra.mrb[0].mxu0 %v665
      %v1095 = vpop.f32.mrb[0].mxu0
      %v1096 = vadd.f32 0.0, %v1095
      %v1097 = vpop.f32.mrb[0].mxu0
      %1098 = vdwg.mxu0
      %v1099 = vld [vmem:[%s9] sm:$0xff]
      %v1100 = vld [vmem:[%s9 + $0x8] sm:$0xff]
      %v1101 = vld [vmem:[%s9 + $0x10] sm:$0xff]
      %v1102 = vld [vmem:[%s9 + $0x18] sm:$0xff]
      %v1103 = vld [vmem:[%s9 + $0x20] sm:$0xff]
      %v1104 = vld [vmem:[%s9 + $0x28] sm:$0xff]
      %v1105 = vld [vmem:[%s9 + $0x30] sm:$0xff]
      %v1106 = vld [vmem:[%s9 + $0x38] sm:$0xff]
      %v1107 = vld [vmem:[%s9 + $0x40] sm:$0xff]
      %v1108 = vld [vmem:[%s9 + $0x48] sm:$0xff]
      %v1109 = vld [vmem:[%s9 + $0x50] sm:$0xff]
      %v1110 = vld [vmem:[%s9 + $0x58] sm:$0xff]
      %v1111 = vld [vmem:[%s9 + $0x60] sm:$0xff]
      %v1112 = vld [vmem:[%s9 + $0x68] sm:$0xff]
      %v1113 = vld [vmem:[%s9 + $0x70] sm:$0xff]
      %v1114 = vld [vmem:[%s9 + $0x78] sm:$0xff]
      %v1115 = vld [vmem:[%s9 + $0x80] sm:$0xff]
      %v1116 = vld [vmem:[%s9 + $0x88] sm:$0xff]
      %v1117 = vld [vmem:[%s9 + $0x90] sm:$0xff]
      %v1118 = vld [vmem:[%s9 + $0x98] sm:$0xff]
      %v1119 = vld [vmem:[%s9 + $0xa0] sm:$0xff]
      %v1120 = vld [vmem:[%s9 + $0xa8] sm:$0xff]
      %v1121 = vld [vmem:[%s9 + $0xb0] sm:$0xff]
      %v1122 = vld [vmem:[%s9 + $0xb8] sm:$0xff]
      %v1123 = vld [vmem:[%s9 + $0xc0] sm:$0xff]
      %v1124 = vld [vmem:[%s9 + $0xc8] sm:$0xff]
      %v1125 = vld [vmem:[%s9 + $0xd0] sm:$0xff]
      %v1126 = vld [vmem:[%s9 + $0xd8] sm:$0xff]
      %v1127 = vld [vmem:[%s9 + $0xe0] sm:$0xff]
      %v1128 = vld [vmem:[%s9 + $0xe8] sm:$0xff]
      %v1129 = vld [vmem:[%s9 + $0xf0] sm:$0xff]
      %v1130 = vld [vmem:[%s9 + $0xf8] sm:$0xff]
      %v1131 = vld [vmem:[%s10] sm:$0x1]
      %v1133 = vlaneseq
      %v1134 = vshrl.u32 %v1133, 7
      %v1135 = vsub.s32 0, %v1134
      %v1136 = vrot.slane %v1131, %v1135
      %1138 = vmatprep.subr.mxu0 0.0
      %1139 = vmatpush1.msra.mxu0 %v1099
      %1140 = vmatprep.subr.mxu0 0.0
      %1141 = vmatpush1.msra.mxu0 %v1100
      %1142 = vmatprep.subr.mxu0 0.0
      %1143 = vmatpush1.msra.mxu0 %v1101
      %1144 = vmatprep.subr.mxu0 0.0
      %1145 = vmatpush1.msra.mxu0 %v1102
      %1146 = vmatprep.subr.mxu0 0.0
      %1147 = vmatpush1.msra.mxu0 %v1103
      %1148 = vmatprep.subr.mxu0 0.0
      %1149 = vmatpush1.msra.mxu0 %v1104
      %1150 = vmatprep.subr.mxu0 0.0
      %1151 = vmatpush1.msra.mxu0 %v1105
      %1152 = vmatprep.subr.mxu0 0.0
      %1153 = vmatpush1.msra.mxu0 %v1106
      %1154 = vmatprep.subr.mxu0 0.0
      %1155 = vmatpush1.msra.mxu0 %v1107
      %1156 = vmatprep.subr.mxu0 0.0
      %1157 = vmatpush1.msra.mxu0 %v1108
      %1158 = vmatprep.subr.mxu0 0.0
      %1159 = vmatpush1.msra.mxu0 %v1109
      %1160 = vmatprep.subr.mxu0 0.0
      %1161 = vmatpush1.msra.mxu0 %v1110
      %1162 = vmatprep.subr.mxu0 0.0
      %1163 = vmatpush1.msra.mxu0 %v1111
      %1164 = vmatprep.subr.mxu0 0.0
      %1165 = vmatpush1.msra.mxu0 %v1112
      %1166 = vmatprep.subr.mxu0 0.0
      %1167 = vmatpush1.msra.mxu0 %v1113
      %1168 = vmatprep.subr.mxu0 0.0
      %1169 = vmatpush1.msra.mxu0 %v1114
      %1170 = vmatprep.subr.mxu0 0.0
      %1171 = vmatpush1.msra.mxu0 %v1115
      %1172 = vmatprep.subr.mxu0 0.0
      %1173 = vmatpush1.msra.mxu0 %v1116
      %1174 = vmatprep.subr.mxu0 0.0
      %1175 = vmatpush1.msra.mxu0 %v1117
      %1176 = vmatprep.subr.mxu0 0.0
      %1177 = vmatpush1.msra.mxu0 %v1118
      %1178 = vmatprep.subr.mxu0 0.0
      %1179 = vmatpush1.msra.mxu0 %v1119
      %1180 = vmatprep.subr.mxu0 0.0
      %1181 = vmatpush1.msra.mxu0 %v1120
      %1182 = vmatprep.subr.mxu0 0.0
      %1183 = vmatpush1.msra.mxu0 %v1121
      %1184 = vmatprep.subr.mxu0 0.0
      %1185 = vmatpush1.msra.mxu0 %v1122
      %1186 = vmatprep.subr.mxu0 0.0
      %1187 = vmatpush1.msra.mxu0 %v1123
      %1188 = vmatprep.subr.mxu0 0.0
      %1189 = vmatpush1.msra.mxu0 %v1124
      %1190 = vmatprep.subr.mxu0 0.0
      %1191 = vmatpush1.msra.mxu0 %v1125
      %1192 = vmatprep.subr.mxu0 0.0
      %1193 = vmatpush1.msra.mxu0 %v1126
      %1194 = vmatprep.subr.mxu0 0.0
      %1195 = vmatpush1.msra.mxu0 %v1127
      %1196 = vmatprep.subr.mxu0 0.0
      %1197 = vmatpush1.msra.mxu0 %v1128
      %1198 = vmatprep.subr.mxu0 0.0
      %1199 = vmatpush1.msra.mxu0 %v1129
      %1200 = vmatprep.subr.mxu0 0.0
      %1201 = vmatpush1.msra.mxu0 %v1130
      %1202 = vmatprep.mubr.f32.mxu0 %v1028
      %1203 = vmatmul.mubr.f32.gmra.mrb[0].mxu0 %v1096
      %v1204 = vpop.f32.mrb[0].mxu0
      %v1205 = vadd.f32 %v1136, %v1204
      %v1206 = vpop.f32.mrb[0].mxu0
      %1207 = vdwg.mxu0
      %v1208 = vmax.f32 %v1205, 0.0
      %v1209 = vmul.f32 %v1208, %v660
      %v1210 = vld [vmem:[%s11] sm:$0xff]
      %v1211 = vld [vmem:[%s11 + $0x8] sm:$0xff]
      %v1212 = vld [vmem:[%s11 + $0x10] sm:$0xff]
      %v1213 = vld [vmem:[%s11 + $0x18] sm:$0xff]
      %v1214 = vld [vmem:[%s11 + $0x20] sm:$0xff]
      %v1215 = vld [vmem:[%s11 + $0x28] sm:$0xff]
      %v1216 = vld [vmem:[%s11 + $0x30] sm:$0xff]
      %v1217 = vld [vmem:[%s11 + $0x38] sm:$0xff]
      %v1218 = vld [vmem:[%s11 + $0x40] sm:$0xff]
      %v1219 = vld [vmem:[%s11 + $0x48] sm:$0xff]
      %v1220 = vld [vmem:[%s11 + $0x50] sm:$0xff]
      %v1221 = vld [vmem:[%s11 + $0x58] sm:$0xff]
      %v1222 = vld [vmem:[%s11 + $0x60] sm:$0xff]
      %v1223 = vld [vmem:[%s11 + $0x68] sm:$0xff]
      %v1224 = vld [vmem:[%s11 + $0x70] sm:$0xff]
      %v1225 = vld [vmem:[%s11 + $0x78] sm:$0xff]
      %v1226 = vld [vmem:[%s12] sm:$0x1]
      %v1228 = vlaneseq
      %v1229 = vshrl.u32 %v1228, 7
      %v1230 = vsub.s32 0, %v1229
      %v1231 = vrot.slane %v1226, %v1230
      %1233 = vmatprep.subr.mxu0 0.0
      %1234 = vmatpush1.msra.mxu0 %v1210
      %1235 = vmatprep.subr.mxu0 0.0
      %1236 = vmatpush1.msra.mxu0 %v1211
      %1237 = vmatprep.subr.mxu0 0.0
      %1238 = vmatpush1.msra.mxu0 %v1212
      %1239 = vmatprep.subr.mxu0 0.0
      %1240 = vmatpush1.msra.mxu0 %v1213
      %1241 = vmatprep.subr.mxu0 0.0
      %1242 = vmatpush1.msra.mxu0 %v1214
      %1243 = vmatprep.subr.mxu0 0.0
      %1244 = vmatpush1.msra.mxu0 %v1215
      %1245 = vmatprep.subr.mxu0 0.0
      %1246 = vmatpush1.msra.mxu0 %v1216
      %1247 = vmatprep.subr.mxu0 0.0
      %1248 = vmatpush1.msra.mxu0 %v1217
      %1249 = vmatprep.subr.mxu0 0.0
      %1250 = vmatpush1.msra.mxu0 %v1218
      %1251 = vmatprep.subr.mxu0 0.0
      %1252 = vmatpush1.msra.mxu0 %v1219
      %1253 = vmatprep.subr.mxu0 0.0
      %1254 = vmatpush1.msra.mxu0 %v1220
      %1255 = vmatprep.subr.mxu0 0.0
      %1256 = vmatpush1.msra.mxu0 %v1221
      %1257 = vmatprep.subr.mxu0 0.0
      %1258 = vmatpush1.msra.mxu0 %v1222
      %1259 = vmatprep.subr.mxu0 0.0
      %1260 = vmatpush1.msra.mxu0 %v1223
      %1261 = vmatprep.subr.mxu0 0.0
      %1262 = vmatpush1.msra.mxu0 %v1224
      %1263 = vmatprep.subr.mxu0 0.0
      %1264 = vmatpush1.msra.mxu0 %v1225
      %1265 = vmatprep.subr.mxu0 0.0
      %1266 = vmatpush1.msra.mxu0 0.0
      %1267 = vmatprep.subr.mxu0 0.0
      %1268 = vmatpush1.msra.mxu0 0.0
      %1269 = vmatprep.subr.mxu0 0.0
      %1270 = vmatpush1.msra.mxu0 0.0
      %1271 = vmatprep.subr.mxu0 0.0
      %1272 = vmatpush1.msra.mxu0 0.0
      %1273 = vmatprep.subr.mxu0 0.0
      %1274 = vmatpush1.msra.mxu0 0.0
      %1275 = vmatprep.subr.mxu0 0.0
      %1276 = vmatpush1.msra.mxu0 0.0
      %1277 = vmatprep.subr.mxu0 0.0
      %1278 = vmatpush1.msra.mxu0 0.0
      %1279 = vmatprep.subr.mxu0 0.0
      %1280 = vmatpush1.msra.mxu0 0.0
      %1281 = vmatprep.subr.mxu0 0.0
      %1282 = vmatpush1.msra.mxu0 0.0
      %1283 = vmatprep.subr.mxu0 0.0
      %1284 = vmatpush1.msra.mxu0 0.0
      %1285 = vmatprep.subr.mxu0 0.0
      %1286 = vmatpush1.msra.mxu0 0.0
      %1287 = vmatprep.subr.mxu0 0.0
      %1288 = vmatpush1.msra.mxu0 0.0
      %1289 = vmatprep.subr.mxu0 0.0
      %1290 = vmatpush1.msra.mxu0 0.0
      %1291 = vmatprep.subr.mxu0 0.0
      %1292 = vmatpush1.msra.mxu0 0.0
      %1293 = vmatprep.subr.mxu0 0.0
      %1294 = vmatpush1.msra.mxu0 0.0
      %1295 = vmatprep.subr.mxu0 0.0
      %1296 = vmatpush1.msra.mxu0 0.0
      %1297 = vmatprep.mubr.f32.mxu0 0.0
      %1298 = vmatmul.mubr.f32.gmra.mrb[0].mxu0 %v1209
      %v1299 = vpop.f32.mrb[0].mxu0
      %v1300 = vadd.f32 %v1231, %v1299
      %v1301 = vpop.f32.mrb[0].mxu0
      %1302 = vdwg.mxu0
      %v1303 = vmax.f32 %v1300, 0.0
      %v1304 = vld [vmem:[%s13] sm:$0xff]
      %v1305 = vld [vmem:[%s13 + $0x8] sm:$0xff]
      %v1306 = vld [vmem:[%s13 + $0x10] sm:$0xff]
      %v1307 = vld [vmem:[%s13 + $0x18] sm:$0xff]
      %v1308 = vld [vmem:[%s13 + $0x20] sm:$0xff]
      %v1309 = vld [vmem:[%s13 + $0x28] sm:$0xff]
      %v1310 = vld [vmem:[%s13 + $0x30] sm:$0xff]
      %v1311 = vld [vmem:[%s13 + $0x38] sm:$0xff]
      %v1312 = vld [vmem:[%s13 + $0x40] sm:$0xff]
      %v1313 = vld [vmem:[%s13 + $0x48] sm:$0xff]
      %v1314 = vld [vmem:[%s13 + $0x50] sm:$0xff]
      %v1315 = vld [vmem:[%s13 + $0x58] sm:$0xff]
      %v1316 = vld [vmem:[%s13 + $0x60] sm:$0xff]
      %v1317 = vld [vmem:[%s13 + $0x68] sm:$0xff]
      %v1318 = vld [vmem:[%s13 + $0x70] sm:$0xff]
      %v1319 = vld [vmem:[%s13 + $0x78] sm:$0xff]
      %v1320 = vld [vmem:[%s14] sm:$0x1]
      %v1322 = vlaneseq
      %v1323 = vshrl.u32 %v1322, 7
      %v1324 = vsub.s32 0, %v1323
      %v1325 = vrot.slane %v1320, %v1324
      %1327 = vmatprep.subr.mxu0 0.0
      %1328 = vmatpush1.msra.mxu0 %v1304
      %1329 = vmatprep.subr.mxu0 0.0
      %1330 = vmatpush1.msra.mxu0 %v1305
      %1331 = vmatprep.subr.mxu0 0.0
      %1332 = vmatpush1.msra.mxu0 %v1306
      %1333 = vmatprep.subr.mxu0 0.0
      %1334 = vmatpush1.msra.mxu0 %v1307
      %1335 = vmatprep.subr.mxu0 0.0
      %1336 = vmatpush1.msra.mxu0 %v1308
      %1337 = vmatprep.subr.mxu0 0.0
      %1338 = vmatpush1.msra.mxu0 %v1309
      %1339 = vmatprep.subr.mxu0 0.0
      %1340 = vmatpush1.msra.mxu0 %v1310
      %1341 = vmatprep.subr.mxu0 0.0
      %1342 = vmatpush1.msra.mxu0 %v1311
      %1343 = vmatprep.subr.mxu0 0.0
      %1344 = vmatpush1.msra.mxu0 %v1312
      %1345 = vmatprep.subr.mxu0 0.0
      %1346 = vmatpush1.msra.mxu0 %v1313
      %1347 = vmatprep.subr.mxu0 0.0
      %1348 = vmatpush1.msra.mxu0 %v1314
      %1349 = vmatprep.subr.mxu0 0.0
      %1350 = vmatpush1.msra.mxu0 %v1315
      %1351 = vmatprep.subr.mxu0 0.0
      %1352 = vmatpush1.msra.mxu0 %v1316
      %1353 = vmatprep.subr.mxu0 0.0
      %1354 = vmatpush1.msra.mxu0 %v1317
      %1355 = vmatprep.subr.mxu0 0.0
      %1356 = vmatpush1.msra.mxu0 %v1318
      %1357 = vmatprep.subr.mxu0 0.0
      %1358 = vmatpush1.msra.mxu0 %v1319
      %1359 = vmatprep.subr.mxu0 0.0
      %1360 = vmatpush1.msra.mxu0 0.0
      %1361 = vmatprep.subr.mxu0 0.0
      %1362 = vmatpush1.msra.mxu0 0.0
      %1363 = vmatprep.subr.mxu0 0.0
      %1364 = vmatpush1.msra.mxu0 0.0
      %1365 = vmatprep.subr.mxu0 0.0
      %1366 = vmatpush1.msra.mxu0 0.0
      %1367 = vmatprep.subr.mxu0 0.0
      %1368 = vmatpush1.msra.mxu0 0.0
      %1369 = vmatprep.subr.mxu0 0.0
      %1370 = vmatpush1.msra.mxu0 0.0
      %1371 = vmatprep.subr.mxu0 0.0
      %1372 = vmatpush1.msra.mxu0 0.0
      %1373 = vmatprep.subr.mxu0 0.0
      %1374 = vmatpush1.msra.mxu0 0.0
      %1375 = vmatprep.subr.mxu0 0.0
      %1376 = vmatpush1.msra.mxu0 0.0
      %1377 = vmatprep.subr.mxu0 0.0
      %1378 = vmatpush1.msra.mxu0 0.0
      %1379 = vmatprep.subr.mxu0 0.0
      %1380 = vmatpush1.msra.mxu0 0.0
      %1381 = vmatprep.subr.mxu0 0.0
      %1382 = vmatpush1.msra.mxu0 0.0
      %1383 = vmatprep.subr.mxu0 0.0
      %1384 = vmatpush1.msra.mxu0 0.0
      %1385 = vmatprep.subr.mxu0 0.0
      %1386 = vmatpush1.msra.mxu0 0.0
      %1387 = vmatprep.subr.mxu0 0.0
      %1388 = vmatpush1.msra.mxu0 0.0
      %1389 = vmatprep.subr.mxu0 0.0
      %1390 = vmatpush1.msra.mxu0 0.0
      %1391 = vmatprep.mubr.f32.mxu0 0.0
      %1392 = vmatmul.mubr.f32.gmra.mrb[0].mxu0 %v1303
      %v1393 = vpop.f32.mrb[0].mxu0
      %v1394 = vadd.f32 %v1325, %v1393
      %v1395 = vpop.f32.mrb[0].mxu0
      %1396 = vdwg.mxu0
      %v1397 = vmax.f32 %v1394, 0.0
      %v1398 = vld [vmem:[%s15] sm:$0xff]
      %v1399 = vld [vmem:[%s15 + $0x8] sm:$0xff]
      %v1400 = vld [vmem:[%s15 + $0x10] sm:$0xff]
      %v1401 = vld [vmem:[%s15 + $0x18] sm:$0xff]
      %v1402 = vld [vmem:[%s15 + $0x20] sm:$0xff]
      %v1403 = vld [vmem:[%s15 + $0x28] sm:$0xff]
      %v1404 = vld [vmem:[%s15 + $0x30] sm:$0xff]
      %v1405 = vld [vmem:[%s15 + $0x38] sm:$0xff]
      %v1406 = vld [vmem:[%s15 + $0x40] sm:$0xff]
      %v1407 = vld [vmem:[%s15 + $0x48] sm:$0xff]
      %v1408 = vld [vmem:[%s15 + $0x50] sm:$0xff]
      %v1409 = vld [vmem:[%s15 + $0x58] sm:$0xff]
      %v1410 = vld [vmem:[%s15 + $0x60] sm:$0xff]
      %v1411 = vld [vmem:[%s15 + $0x68] sm:$0xff]
      %v1412 = vld [vmem:[%s15 + $0x70] sm:$0xff]
      %v1413 = vld [vmem:[%s15 + $0x78] sm:$0xff]
      %v1414 = vld [vmem:[%s16] sm:$0x1]
      %v1416 = vlaneseq
      %v1417 = vshrl.u32 %v1416, 7
      %v1418 = vsub.s32 0, %v1417
      %v1419 = vrot.slane %v1414, %v1418
      %1421 = vmatprep.subr.mxu0 0.0
      %1422 = vmatpush1.msra.mxu0 %v1398
      %1423 = vmatprep.subr.mxu0 0.0
      %1424 = vmatpush1.msra.mxu0 %v1399
      %1425 = vmatprep.subr.mxu0 0.0
      %1426 = vmatpush1.msra.mxu0 %v1400
      %1427 = vmatprep.subr.mxu0 0.0
      %1428 = vmatpush1.msra.mxu0 %v1401
      %1429 = vmatprep.subr.mxu0 0.0
      %1430 = vmatpush1.msra.mxu0 %v1402
      %1431 = vmatprep.subr.mxu0 0.0
      %1432 = vmatpush1.msra.mxu0 %v1403
      %1433 = vmatprep.subr.mxu0 0.0
      %1434 = vmatpush1.msra.mxu0 %v1404
      %1435 = vmatprep.subr.mxu0 0.0
      %1436 = vmatpush1.msra.mxu0 %v1405
      %1437 = vmatprep.subr.mxu0 0.0
      %1438 = vmatpush1.msra.mxu0 %v1406
      %1439 = vmatprep.subr.mxu0 0.0
      %1440 = vmatpush1.msra.mxu0 %v1407
      %1441 = vmatprep.subr.mxu0 0.0
      %1442 = vmatpush1.msra.mxu0 %v1408
      %1443 = vmatprep.subr.mxu0 0.0
      %1444 = vmatpush1.msra.mxu0 %v1409
      %1445 = vmatprep.subr.mxu0 0.0
      %1446 = vmatpush1.msra.mxu0 %v1410
      %1447 = vmatprep.subr.mxu0 0.0
      %1448 = vmatpush1.msra.mxu0 %v1411
      %1449 = vmatprep.subr.mxu0 0.0
      %1450 = vmatpush1.msra.mxu0 %v1412
      %1451 = vmatprep.subr.mxu0 0.0
      %1452 = vmatpush1.msra.mxu0 %v1413
      %1453 = vmatprep.subr.mxu0 0.0
      %1454 = vmatpush1.msra.mxu0 0.0
      %1455 = vmatprep.subr.mxu0 0.0
      %1456 = vmatpush1.msra.mxu0 0.0
      %1457 = vmatprep.subr.mxu0 0.0
      %1458 = vmatpush1.msra.mxu0 0.0
      %1459 = vmatprep.subr.mxu0 0.0
      %1460 = vmatpush1.msra.mxu0 0.0
      %1461 = vmatprep.subr.mxu0 0.0
      %1462 = vmatpush1.msra.mxu0 0.0
      %1463 = vmatprep.subr.mxu0 0.0
      %1464 = vmatpush1.msra.mxu0 0.0
      %1465 = vmatprep.subr.mxu0 0.0
      %1466 = vmatpush1.msra.mxu0 0.0
      %1467 = vmatprep.subr.mxu0 0.0
      %1468 = vmatpush1.msra.mxu0 0.0
      %1469 = vmatprep.subr.mxu0 0.0
      %1470 = vmatpush1.msra.mxu0 0.0
      %1471 = vmatprep.subr.mxu0 0.0
      %1472 = vmatpush1.msra.mxu0 0.0
      %1473 = vmatprep.subr.mxu0 0.0
      %1474 = vmatpush1.msra.mxu0 0.0
      %1475 = vmatprep.subr.mxu0 0.0
      %1476 = vmatpush1.msra.mxu0 0.0
      %1477 = vmatprep.subr.mxu0 0.0
      %1478 = vmatpush1.msra.mxu0 0.0
      %1479 = vmatprep.subr.mxu0 0.0
      %1480 = vmatpush1.msra.mxu0 0.0
      %1481 = vmatprep.subr.mxu0 0.0
      %1482 = vmatpush1.msra.mxu0 0.0
      %1483 = vmatprep.subr.mxu0 0.0
      %1484 = vmatpush1.msra.mxu0 0.0
      %1485 = vmatprep.mubr.f32.mxu0 0.0
      %1486 = vmatmul.mubr.f32.gmra.mrb[0].mxu0 %v1397
      %v1487 = vpop.f32.mrb[0].mxu0
      %v1488 = vadd.f32 %v1419, %v1487
      %v1489 = vpop.f32.mrb[0].mxu0
      %1490 = vdwg.mxu0
      %1491 = vst [vmem:[%s560] sm:$0xff] %v1488
      %p1492 = scmp.lt.s32.totalorder %s28, 1
      %s1493 = scalar_select %p1492, %s28, 1
      %s1494 = smul.addr %s1493, 8
      %s1495 = scalar_lea.vmem %s17, %s1494
      // Predicated region
      $region89: #{_forward_impl.1} parent=87 // pred_check
        %p1496 = pneg %p413
      $region90: #{_forward_impl.1} parent=87 // pred_check_branch
        %1498 = sbr.rel (%p1496) target = $region92
      $region91: #{_forward_impl.1} parent=87 // pred_region
        _
      $region92: #{_forward_impl.1} parent=87 // pred_fallthru
        _
    $region88: #{_forward_impl.1} parent=5 // pred_fallthru
      _
    %p1499 = scmp.le.s32.totalorder 2, %s23
    // Predicated region
    $region93: #{_forward_impl.1} parent=5 // pred_check
      %p1500 = pneg %p1499
    $region94: #{_forward_impl.1} parent=5 // pred_check_branch
      %1502 = sbr.rel (%p1500) target = $region96
    $region95: #{_forward_impl.1} parent=5 // pred_region
      %s1503 = ssub.s32 %s23, 2
      // Predicated region
      $region97: #{_forward_impl.1} parent=95 // pred_check
        %p1504 = pneg %p419
      $region98: #{_forward_impl.1} parent=95 // pred_check_branch
        %1506 = sbr.rel (%p1504) target = $region100
      $region99: #{_forward_impl.1} parent=95 // pred_region
        %p1507 = scmp.lt.s32.totalorder %s29, 1
        %s1508 = scalar_select %p1507, %s29, 1
        %s1509 = smul.addr %s1508, 8
        %s1510 = scalar_lea.vmem %s17, %s1509
      $region100: #{_forward_impl.1} parent=95 // pred_fallthru
        _
    $region96: #{_forward_impl.1} parent=5 // pred_fallthru
      _
  $region6: #{_forward_impl.1} parent=0 // loop_footer
    %s27 = sadd.s32 1, %s23
  $region7: #{_forward_impl.1} parent=0 // loop_footer_branch
    %22 = sbr.rel target = $region3
  $region8: #{_forward_impl.1} parent=0 // loop_exit
    _

</llo_original>
